<compile_context>
chip_gen: v7x
topology: tpu7x:2x2x1
jax: 0.10.0
libtpu: 0.0.40
codegen_flags: <defaults>
</compile_context>

<pallas_src>
import jax
import jax.numpy as jnp
from jax.experimental import pallas as pl
from jax.experimental.pallas import tpu as pltpu

SELU_ALPHA = 1.6732632423543772
SELU_SCALE = 1.0507009873554805
LN_EPS = 1e-5


def _round_up(x, m):
    return (x + m - 1) // m * m


# ---------------------------------------------------------------------------
# Kernel
# ---------------------------------------------------------------------------
def _make_kernel(w_meta, v_meta, vocab, n_pert):
    """Builds the fused forward kernel; all layer offsets/sizes are static."""

    def kernel(idx_ref, ctrl_ref, w_ref, v_ref, out_ref):
        f32 = jnp.float32

        def W(name):                       # static slice of the packed weight stack
            off, rows, cols = w_meta[name]
            return w_ref[off:off + rows, :cols]

        def V(name):                       # static slice of the packed vector stack
            row, cols = v_meta[name]
            return v_ref[row:row + 1, :cols]

        def dot(x, w):                     # MXU matmul, always accumulate in f32
            return jnp.dot(x.astype(w.dtype), w, preferred_element_type=f32)

        def ln_selu(x, gamma, beta):       # f32 LayerNorm + SELU (VPU/XLU/EUP)
            mu = jnp.mean(x, axis=-1, keepdims=True)
            var = jnp.mean((x - mu) * (x - mu), axis=-1, keepdims=True)
            x = (x - mu) * jax.lax.rsqrt(var + LN_EPS) * gamma + beta
            return SELU_SCALE * jnp.where(x > 0, x, SELU_ALPHA * (jnp.exp(x) - 1.0))

        # ---- perturbation one-hot counts: embd[pert_idx].sum(1) == counts @ embd.
        # The embedding matmul itself is folded into Wcg in the wrapper, so the
        # counts feed the generator's first layer directly.
        idx = idx_ref[...]                                  # (TB, P) int32
        tb = idx.shape[0]
        lane = jax.lax.broadcasted_iota(jnp.int32, (tb, vocab), 1)
        counts = jnp.zeros((tb, vocab), f32)
        for p in range(n_pert):                             # static, tiny
            counts = counts + (lane == idx[:, p:p + 1]).astype(f32)

        # ---- encoder MLP: [Linear -> LayerNorm -> SELU] x2 ----
        h = dot(ctrl_ref[...], W("ew1")) + V("eb1")
        h = ln_selu(h, V("eg1"), V("ebt1"))
        h = dot(h, W("ew2")) + V("eb2")
        h = ln_selu(h, V("eg2"), V("ebt2"))

        # ---- generator on cat([input_gene, input_ctrl], -1) ----
        # Encoder output layer (ewo, ebo) and embedding matmul folded away:
        #   cat @ W1 + gb1 = counts @ (embd@gwg) + h @ (ewo@gwc) + (gb1 + ebo@gwc)
        g = dot(counts, W("wcg")) + dot(h, W("whg")) + V("gb1f")
        g = ln_selu(g, V("gg1"), V("gbt1"))
        g = dot(g, W("gw2")) + V("gb2")
        g = ln_selu(g, V("gg2"), V("gbt2"))

        # Unpadded (TB, n_genes) store: lane-sparse masked vst (store slot has
        # slack); HBM writeback stays minimal and no wrapper slice is needed.
        out_ref[...] = (dot(g, W("gwo")) + V("gbo")).astype(out_ref.dtype)

    return kernel


# ---------------------------------------------------------------------------
# Parameter packing (wrapper side, one-off)
# ---------------------------------------------------------------------------
def _pack_weights(named, dtype, row_align=16):
    """Row-stack 2-D weights into one resident array; static in-kernel slicing."""
    wmax = max(a.shape[1] for _, a in named)
    pieces, meta, off = [], {}, 0
    for name, a in named:
        rows, cols = a.shape
        meta[name] = (off, rows, cols)
        pieces.append(jnp.pad(a.astype(jnp.float32), ((0, 0), (0, wmax - cols))))
        pad_r = (-rows) % row_align        # keep every slice sublane-tile aligned (bf16: 16)
        if pad_r:
            pieces.append(jnp.zeros((pad_r, wmax), jnp.float32))
        off += rows + pad_r
    return jnp.concatenate(pieces, axis=0).astype(dtype), meta


def _pack_vectors(named):
    """Stack the (1, h) bias / LayerNorm vectors into one resident f32 array."""
    wmax = max(a.shape[1] for _, a in named)
    pieces, meta = [], {}
    for i, (name, a) in enumerate(named):
        meta[name] = (i, a.shape[1])
        pieces.append(jnp.pad(a.astype(jnp.float32), ((0, 0), (0, wmax - a.shape[1]))))
    return jnp.concatenate(pieces, axis=0), meta


# ---------------------------------------------------------------------------
# Forward wrapper
# ---------------------------------------------------------------------------
def scouter_forward(pert_idx, ctrl_exp, params, *, row_tile=2048,
                    weight_dtype=jnp.bfloat16):
    """Batch-tiled fused Pallas forward.

    pert_idx:     (B, P) integer indices of perturbed genes.
    ctrl_exp:     (B, n_genes) control expression.
    weight_dtype: MXU operand dtype (bf16 default; pass jnp.float32 for the
                  exact path).  Accumulation / LayerNorm / SELU stay f32.
    """
    B, P = pert_idx.shape
    n_genes = ctrl_exp.shape[1]
    vocab, _ = params["embd"].shape
    h1 = params["ew1"].shape[1]
    h2 = params["ew2"].shape[1]
    d1 = params["gwg"].shape[1]
    d2 = params["gw2"].shape[1]
    assert params["gwo"].shape[1] == n_genes

    f32 = jnp.float32
    # ---- algebraic folds of the no-nonlinearity linear pairs (once, in f32) ----
    wcg = params["embd"].astype(f32) @ params["gwg"].astype(f32)        # (vocab, d1)
    whg = params["ewo"].astype(f32) @ params["gwc"].astype(f32)         # (h2, d1)
    gb1f = params["gb1"].astype(f32) + params["ebo"].astype(f32) @ params["gwc"].astype(f32)

    w_stack, w_meta = _pack_weights(
        [("ew1", params["ew1"]), ("ew2", params["ew2"]),
         ("wcg", wcg), ("whg", whg),
         ("gw2", params["gw2"]), ("gwo", params["gwo"])], weight_dtype)
    v_stack, v_meta = _pack_vectors(
        [("eb1", params["eb1"]), ("eg1", params["eg1"]), ("ebt1", params["ebt1"]),
         ("eb2", params["eb2"]), ("eg2", params["eg2"]), ("ebt2", params["ebt2"]),
         ("gb1f", gb1f), ("gg1", params["gg1"]), ("gbt1", params["gbt1"]),
         ("gb2", params["gb2"]), ("gg2", params["gg2"]), ("gbt2", params["gbt2"]),
         ("gbo", params["gbo"])])

    pert_idx = pert_idx.astype(jnp.int32)
    ctrl = ctrl_exp.astype(weight_dtype)

    # Row tile: multiple of 8 sublanes; large (per-row streamed footprint is tiny)
    # to amortize the ~0.35us/grid-step overhead, but capped at ceil(B/2) so the
    # grid is >= 2 and both of v7x's TensorCores get balanced work.
    tb = _round_up(max(8, min(row_tile, -(-B // 2))), 8)
    grid = (pl.cdiv(B, tb),)

    itemsize = jnp.dtype(weight_dtype).itemsize
    in_specs = [
        pl.BlockSpec((tb, P), lambda i: (i, 0)),             # streamed pert indices
        pl.BlockSpec((tb, n_genes), lambda i: (i, 0)),        # streamed ctrl expression
        pl.BlockSpec(w_stack.shape, lambda i: (0, 0)),        # resident packed weights
        pl.BlockSpec(v_stack.shape, lambda i: (0, 0)),        # resident packed vectors
    ]
    out_spec = pl.BlockSpec((tb, n_genes), lambda i: (i, 0))

    # Advisory cost estimate for XLA scheduling.
    flops = 2 * B * (n_genes * h1 + h1 * h2 + vocab * d1 + h2 * d1
                     + d1 * d2 + d2 * n_genes)
    transcendentals = B * (h1 + h2 + d1 + d2)
    bytes_accessed = int(pert_idx.nbytes + B * n_genes * itemsize
                         + w_stack.nbytes + v_stack.nbytes + B * n_genes * 4)

    # VMEM footprint (lane-padded tiles, double-buffered streams).  Only raise
    # the scoped limit past the 16 MiB v5e default when actually needed, and cap
    # below physical VMEM (v7x has only 64 MiB).
    def tile_bytes(rows, cols, isz):
        return rows * _round_up(cols, 128) * isz
    vmem_est = (tile_bytes(*w_stack.shape, itemsize)
                + tile_bytes(*v_stack.shape, 4)
                + 2 * (tile_bytes(tb, P, 4) + tile_bytes(tb, n_genes, itemsize)
                       + tile_bytes(tb, n_genes, 4)))
    vmem_limit = None
    if vmem_est > 16 * 2**20:
        try:
            cap = int(pltpu.get_tpu_info().vmem_capacity_bytes * 3 // 4)
        except Exception:
            cap = 48 * 2**20
        vmem_limit = int(min(2 * vmem_est, cap))

    kernel = _make_kernel(w_meta, v_meta, vocab, P)
    return pl.pallas_call(
        kernel,
        grid=grid,
        in_specs=in_specs,
        out_specs=out_spec,
        out_shape=jax.ShapeDtypeStruct((B, n_genes), jnp.float32),
        compiler_params=pltpu.CompilerParams(
            dimension_semantics=("parallel",),   # rows independent -> megacore on v7x
            vmem_limit_bytes=vmem_limit),
        cost_estimate=pl.CostEstimate(flops=flops,
                                      transcendentals=transcendentals,
                                      bytes_accessed=bytes_accessed),
    )(pert_idx, ctrl, w_stack, v_stack)


# ---------------------------------------------------------------------------
# Pure-JAX reference (matches the PyTorch forward semantics)
# ---------------------------------------------------------------------------
def scouter_reference(pert_idx, ctrl_exp, p):
    input_gene = p["embd"][pert_idx].sum(axis=1)

    def block(x, w, b, g, bt):
        h = x @ w + b
        mu = h.mean(-1, keepdims=True)
        var = ((h - mu) ** 2).mean(-1, keepdims=True)
        h = (h - mu) / jnp.sqrt(var + LN_EPS) * g + bt
        return SELU_SCALE * jnp.where(h > 0, h, SELU_ALPHA * (jnp.exp(h) - 1.0))

    h = block(ctrl_exp, p["ew1"], p["eb1"], p["eg1"], p["ebt1"])
    h = block(h, p["ew2"], p["eb2"], p["eg2"], p["ebt2"])
    input_ctrl = h @ p["ewo"] + p["ebo"]

    cat = jnp.concatenate([input_gene, input_ctrl], axis=-1)
    w1 = jnp.concatenate([p["gwg"], p["gwc"]], axis=0)
    g = block(cat, w1, p["gb1"], p["gg1"], p["gbt1"])
    g = block(g, p["gw2"], p["gb2"], p["gg2"], p["gbt2"])
    return g @ p["gwo"] + p["gbo"]


def init_params(key, n_genes, n_embd, n_enc, n_out_enc, n_dec):
    keys = iter(jax.random.split(key, 64))

    def w(shape, scale=0.1):
        return (scale * jax.random.normal(next(keys), shape)).astype(jnp.float32)

    def ln(h):  # (gamma, beta) perturbed off ones/zeros to exercise the math
        return (1.0 + w((1, h))), w((1, h))

    h1, h2 = n_enc
    d1, d2 = n_dec
    p = {}
    p["embd"] = w((n_genes, n_embd), scale=0.5)
    # encoder
    p["ew1"], p["eb1"] = w((n_genes, h1)), w((1, h1))
    p["eg1"], p["ebt1"] = ln(h1)
    p["ew2"], p["eb2"] = w((h1, h2)), w((1, h2))
    p["eg2"], p["ebt2"] = ln(h2)
    p["ewo"], p["ebo"] = w((h2, n_out_enc)), w((1, n_out_enc))
    # generator (first linear split into gene-part / ctrl-part of the concat)
    p["gwg"], p["gwc"] = w((n_embd, d1)), w((n_out_enc, d1))
    p["gb1"] = w((1, d1))
    p["gg1"], p["gbt1"] = ln(d1)
    p["gw2"], p["gb2"] = w((d1, d2)), w((1, d2))
    p["gg2"], p["gbt2"] = ln(d2)
    p["gwo"], p["gbo"] = w((d2, n_genes)), w((1, n_genes))
    return p


if __name__ == "__main__":
    B, N_GENES, N_EMBD = 64, 16, 32
    N_ENC, N_OUT_ENC, N_DEC = (32, 32), 32, (32, 32)
    N_PERT = 2  # perturbed genes per sample

    root = jax.random.PRNGKey(0)
    k_p, k_idx, k_ctrl = jax.random.split(root, 3)

    params = init_params(k_p, N_GENES, N_EMBD, N_ENC, N_OUT_ENC, N_DEC)
    pert_idx = jax.random.randint(k_idx, (B, N_PERT), 0, N_GENES, dtype=jnp.int32)
    ctrl_exp = jax.random.normal(k_ctrl, (B, N_GENES), dtype=jnp.float32)

    ref = jax.block_until_ready(scouter_reference(pert_idx, ctrl_exp, params))

    # Exact path (f32 MXU operands): tight tolerance.  Default tiling -> tb=32, grid=(2,).
    out_f32 = jax.block_until_ready(
        scouter_forward(pert_idx, ctrl_exp, params, weight_dtype=jnp.float32))
    assert out_f32.shape == (B, N_GENES), out_f32.shape
    assert jnp.allclose(out_f32, ref, rtol=1e-4, atol=1e-4), \
        float(jnp.max(jnp.abs(out_f32 - ref)))

    # Default path (bf16 MXU operands, f32 accumulation/LN/SELU): loose tolerance.
    out_bf16 = jax.block_until_ready(scouter_forward(pert_idx, ctrl_exp, params))
    assert out_bf16.shape == (B, N_GENES), out_bf16.shape
    assert float(jnp.max(jnp.abs(out_bf16 - ref))) < 0.25, \
        float(jnp.max(jnp.abs(out_bf16 - ref)))

    print("KERNEL_OK")
</pallas_src>

<mosaic_0001>
module attributes {stable_mosaic.version = 11 : i64} {
  func.func @kernel(%arg0: i32, %arg1: memref<32x2xi32, #tpu.memory_space<vmem>>, %arg2: memref<32x16xf32, #tpu.memory_space<vmem>>, %arg3: memref<160x32xf32, #tpu.memory_space<vmem>>, %arg4: memref<13x32xf32, #tpu.memory_space<vmem>>, %arg5: memref<32x16xf32, #tpu.memory_space<vmem>>) attributes {dimension_semantics = [#tpu.dimension_semantics<parallel>], iteration_bounds = array<i64: 2>, scalar_prefetch = 0 : i64, scratch_operands = 0 : i64, tpu.core_type = #tpu.core_type<tc>, window_params = [{transform_indices = @transform_0, window_bounds = array<i64: 32, 2>}, {transform_indices = @transform_1, window_bounds = array<i64: 32, 16>}, {pipeline_mode = #tpu.pipeline_mode<synchronous>, transform_indices = @transform_2, window_bounds = array<i64: 160, 32>}, {pipeline_mode = #tpu.pipeline_mode<synchronous>, transform_indices = @transform_3, window_bounds = array<i64: 13, 32>}, {transform_indices = @transform_4, window_bounds = array<i64: 32, 16>}]} {
    %c0 = arith.constant 0 : index
    %c0_0 = arith.constant 0 : index
    %0 = vector.load %arg1[%c0, %c0_0] : memref<32x2xi32, #tpu.memory_space<vmem>>, vector<32x2xi32>
    %1 = tpu.iota {dimensions = array<i32: 1>} : vector<32x16xi32>
    %cst = arith.constant 0.000000e+00 : f32
    %2 = vector.broadcast %cst : f32 to vector<32x16xf32>
    %3 = vector.extract_strided_slice %0 {offsets = [0, 0], sizes = [32, 1], strides = [1, 1]} : vector<32x2xi32> to vector<32x1xi32>
    %4 = vector.broadcast %3 : vector<32x1xi32> to vector<32x16xi32>
    %5 = arith.cmpi eq, %1, %4 : vector<32x16xi32>
    %6 = arith.extui %5 : vector<32x16xi1> to vector<32x16xi32>
    %7 = arith.sitofp %6 : vector<32x16xi32> to vector<32x16xf32>
    %8 = arith.addf %2, %7 : vector<32x16xf32>
    %9 = vector.extract_strided_slice %0 {offsets = [0, 1], sizes = [32, 1], strides = [1, 1]} : vector<32x2xi32> to vector<32x1xi32>
    %10 = vector.broadcast %9 : vector<32x1xi32> to vector<32x16xi32>
    %11 = arith.cmpi eq, %1, %10 : vector<32x16xi32>
    %12 = arith.extui %11 : vector<32x16xi1> to vector<32x16xi32>
    %13 = arith.sitofp %12 : vector<32x16xi32> to vector<32x16xf32>
    %14 = arith.addf %8, %13 : vector<32x16xf32>
    %c0_1 = arith.constant 0 : index
    %c0_2 = arith.constant 0 : index
    %15 = vector.load %arg2[%c0_1, %c0_2] : memref<32x16xf32, #tpu.memory_space<vmem>>, vector<32x16xf32>
    %c0_3 = arith.constant 0 : index
    %c0_4 = arith.constant 0 : index
    %16 = vector.load %arg3[%c0_3, %c0_4] : memref<160x32xf32, #tpu.memory_space<vmem>>, vector<16x32xf32>
    %cst_5 = arith.constant dense<0.000000e+00> : vector<32x32xf32>
    %17 = tpu.matmul %15, %16, %cst_5 {dimension_numbers = #tpu.dot_dimension_numbers<[1], [0], [0], [1], [0, 0, 1, 1], [], []>} : vector<32x16xf32>, vector<16x32xf32>, vector<32x32xf32> -> vector<32x32xf32>
    %c0_6 = arith.constant 0 : index
    %c0_7 = arith.constant 0 : index
    %18 = vector.load %arg4[%c0_6, %c0_7] : memref<13x32xf32, #tpu.memory_space<vmem>>, vector<1x32xf32>
    %19 = vector.broadcast %18 : vector<1x32xf32> to vector<32x32xf32>
    %20 = arith.addf %17, %19 : vector<32x32xf32>
    %c1 = arith.constant 1 : index
    %c0_8 = arith.constant 0 : index
    %21 = vector.load %arg4[%c1, %c0_8] : memref<13x32xf32, #tpu.memory_space<vmem>>, vector<1x32xf32>
    %c2 = arith.constant 2 : index
    %c0_9 = arith.constant 0 : index
    %22 = vector.load %arg4[%c2, %c0_9] : memref<13x32xf32, #tpu.memory_space<vmem>>, vector<1x32xf32>
    %cst_10 = arith.constant dense<0.000000e+00> : vector<32xf32>
    %23 = vector.multi_reduction <add>, %20, %cst_10 [1] : vector<32x32xf32> to vector<32xf32>
    %24 = vector.shape_cast %23 : vector<32xf32> to vector<32x1xf32>
    %cst_11 = arith.constant 3.200000e+01 : f32
    %25 = vector.broadcast %cst_11 : f32 to vector<32x1xf32>
    %26 = arith.divf %24, %25 : vector<32x1xf32>
    %27 = vector.broadcast %26 : vector<32x1xf32> to vector<32x32xf32>
    %28 = arith.subf %20, %27 : vector<32x32xf32>
    %29 = vector.broadcast %26 : vector<32x1xf32> to vector<32x32xf32>
    %30 = arith.subf %20, %29 : vector<32x32xf32>
    %31 = arith.mulf %28, %30 : vector<32x32xf32>
    %cst_12 = arith.constant dense<0.000000e+00> : vector<32xf32>
    %32 = vector.multi_reduction <add>, %31, %cst_12 [1] : vector<32x32xf32> to vector<32xf32>
    %33 = vector.shape_cast %32 : vector<32xf32> to vector<32x1xf32>
    %cst_13 = arith.constant 3.200000e+01 : f32
    %34 = vector.broadcast %cst_13 : f32 to vector<32x1xf32>
    %35 = arith.divf %33, %34 : vector<32x1xf32>
    %36 = vector.broadcast %26 : vector<32x1xf32> to vector<32x32xf32>
    %37 = arith.subf %20, %36 : vector<32x32xf32>
    %cst_14 = arith.constant 9.99999974E-6 : f32
    %38 = vector.broadcast %cst_14 : f32 to vector<32x1xf32>
    %39 = arith.addf %35, %38 : vector<32x1xf32>
    %40 = math.rsqrt %39 : vector<32x1xf32>
    %41 = vector.broadcast %40 : vector<32x1xf32> to vector<32x32xf32>
    %42 = arith.mulf %37, %41 : vector<32x32xf32>
    %43 = vector.broadcast %21 : vector<1x32xf32> to vector<32x32xf32>
    %44 = arith.mulf %42, %43 : vector<32x32xf32>
    %45 = vector.broadcast %22 : vector<1x32xf32> to vector<32x32xf32>
    %46 = arith.addf %44, %45 : vector<32x32xf32>
    %cst_15 = arith.constant 0.000000e+00 : f32
    %47 = vector.broadcast %cst_15 : f32 to vector<32x32xf32>
    %48 = arith.cmpf ogt, %46, %47 : vector<32x32xf32>
    %49 = math.exp %46 : vector<32x32xf32>
    %cst_16 = arith.constant 1.000000e+00 : f32
    %50 = vector.broadcast %cst_16 : f32 to vector<32x32xf32>
    %51 = arith.subf %49, %50 : vector<32x32xf32>
    %cst_17 = arith.constant 1.67326319 : f32
    %52 = vector.broadcast %cst_17 : f32 to vector<32x32xf32>
    %53 = arith.mulf %52, %51 : vector<32x32xf32>
    %54 = arith.select %48, %46, %53 : vector<32x32xi1>, vector<32x32xf32>
    %cst_18 = arith.constant 1.05070102 : f32
    %55 = vector.broadcast %cst_18 : f32 to vector<32x32xf32>
    %56 = arith.mulf %55, %54 : vector<32x32xf32>
    %c16 = arith.constant 16 : index
    %c0_19 = arith.constant 0 : index
    %57 = vector.load %arg3[%c16, %c0_19] : memref<160x32xf32, #tpu.memory_space<vmem>>, vector<32x32xf32>
    %cst_20 = arith.constant dense<0.000000e+00> : vector<32x32xf32>
    %58 = tpu.matmul %56, %57, %cst_20 {dimension_numbers = #tpu.dot_dimension_numbers<[1], [0], [0], [1], [0, 0, 1, 1], [], []>} : vector<32x32xf32>, vector<32x32xf32>, vector<32x32xf32> -> vector<32x32xf32>
    %c3 = arith.constant 3 : index
    %c0_21 = arith.constant 0 : index
    %59 = vector.load %arg4[%c3, %c0_21] : memref<13x32xf32, #tpu.memory_space<vmem>>, vector<1x32xf32>
    %60 = vector.broadcast %59 : vector<1x32xf32> to vector<32x32xf32>
    %61 = arith.addf %58, %60 : vector<32x32xf32>
    %c4 = arith.constant 4 : index
    %c0_22 = arith.constant 0 : index
    %62 = vector.load %arg4[%c4, %c0_22] : memref<13x32xf32, #tpu.memory_space<vmem>>, vector<1x32xf32>
    %c5 = arith.constant 5 : index
    %c0_23 = arith.constant 0 : index
    %63 = vector.load %arg4[%c5, %c0_23] : memref<13x32xf32, #tpu.memory_space<vmem>>, vector<1x32xf32>
    %cst_24 = arith.constant dense<0.000000e+00> : vector<32xf32>
    %64 = vector.multi_reduction <add>, %61, %cst_24 [1] : vector<32x32xf32> to vector<32xf32>
    %65 = vector.shape_cast %64 : vector<32xf32> to vector<32x1xf32>
    %cst_25 = arith.constant 3.200000e+01 : f32
    %66 = vector.broadcast %cst_25 : f32 to vector<32x1xf32>
    %67 = arith.divf %65, %66 : vector<32x1xf32>
    %68 = vector.broadcast %67 : vector<32x1xf32> to vector<32x32xf32>
    %69 = arith.subf %61, %68 : vector<32x32xf32>
    %70 = vector.broadcast %67 : vector<32x1xf32> to vector<32x32xf32>
    %71 = arith.subf %61, %70 : vector<32x32xf32>
    %72 = arith.mulf %69, %71 : vector<32x32xf32>
    %cst_26 = arith.constant dense<0.000000e+00> : vector<32xf32>
    %73 = vector.multi_reduction <add>, %72, %cst_26 [1] : vector<32x32xf32> to vector<32xf32>
    %74 = vector.shape_cast %73 : vector<32xf32> to vector<32x1xf32>
    %cst_27 = arith.constant 3.200000e+01 : f32
    %75 = vector.broadcast %cst_27 : f32 to vector<32x1xf32>
    %76 = arith.divf %74, %75 : vector<32x1xf32>
    %77 = vector.broadcast %67 : vector<32x1xf32> to vector<32x32xf32>
    %78 = arith.subf %61, %77 : vector<32x32xf32>
    %cst_28 = arith.constant 9.99999974E-6 : f32
    %79 = vector.broadcast %cst_28 : f32 to vector<32x1xf32>
    %80 = arith.addf %76, %79 : vector<32x1xf32>
    %81 = math.rsqrt %80 : vector<32x1xf32>
    %82 = vector.broadcast %81 : vector<32x1xf32> to vector<32x32xf32>
    %83 = arith.mulf %78, %82 : vector<32x32xf32>
    %84 = vector.broadcast %62 : vector<1x32xf32> to vector<32x32xf32>
    %85 = arith.mulf %83, %84 : vector<32x32xf32>
    %86 = vector.broadcast %63 : vector<1x32xf32> to vector<32x32xf32>
    %87 = arith.addf %85, %86 : vector<32x32xf32>
    %cst_29 = arith.constant 0.000000e+00 : f32
    %88 = vector.broadcast %cst_29 : f32 to vector<32x32xf32>
    %89 = arith.cmpf ogt, %87, %88 : vector<32x32xf32>
    %90 = math.exp %87 : vector<32x32xf32>
    %cst_30 = arith.constant 1.000000e+00 : f32
    %91 = vector.broadcast %cst_30 : f32 to vector<32x32xf32>
    %92 = arith.subf %90, %91 : vector<32x32xf32>
    %cst_31 = arith.constant 1.67326319 : f32
    %93 = vector.broadcast %cst_31 : f32 to vector<32x32xf32>
    %94 = arith.mulf %93, %92 : vector<32x32xf32>
    %95 = arith.select %89, %87, %94 : vector<32x32xi1>, vector<32x32xf32>
    %cst_32 = arith.constant 1.05070102 : f32
    %96 = vector.broadcast %cst_32 : f32 to vector<32x32xf32>
    %97 = arith.mulf %96, %95 : vector<32x32xf32>
    %c48 = arith.constant 48 : index
    %c0_33 = arith.constant 0 : index
    %98 = vector.load %arg3[%c48, %c0_33] : memref<160x32xf32, #tpu.memory_space<vmem>>, vector<16x32xf32>
    %cst_34 = arith.constant dense<0.000000e+00> : vector<32x32xf32>
    %99 = tpu.matmul %14, %98, %cst_34 {dimension_numbers = #tpu.dot_dimension_numbers<[1], [0], [0], [1], [0, 0, 1, 1], [], []>} : vector<32x16xf32>, vector<16x32xf32>, vector<32x32xf32> -> vector<32x32xf32>
    %c64 = arith.constant 64 : index
    %c0_35 = arith.constant 0 : index
    %100 = vector.load %arg3[%c64, %c0_35] : memref<160x32xf32, #tpu.memory_space<vmem>>, vector<32x32xf32>
    %cst_36 = arith.constant dense<0.000000e+00> : vector<32x32xf32>
    %101 = tpu.matmul %97, %100, %cst_36 {dimension_numbers = #tpu.dot_dimension_numbers<[1], [0], [0], [1], [0, 0, 1, 1], [], []>} : vector<32x32xf32>, vector<32x32xf32>, vector<32x32xf32> -> vector<32x32xf32>
    %102 = arith.addf %99, %101 : vector<32x32xf32>
    %c6 = arith.constant 6 : index
    %c0_37 = arith.constant 0 : index
    %103 = vector.load %arg4[%c6, %c0_37] : memref<13x32xf32, #tpu.memory_space<vmem>>, vector<1x32xf32>
    %104 = vector.broadcast %103 : vector<1x32xf32> to vector<32x32xf32>
    %105 = arith.addf %102, %104 : vector<32x32xf32>
    %c7 = arith.constant 7 : index
    %c0_38 = arith.constant 0 : index
    %106 = vector.load %arg4[%c7, %c0_38] : memref<13x32xf32, #tpu.memory_space<vmem>>, vector<1x32xf32>
    %c8 = arith.constant 8 : index
    %c0_39 = arith.constant 0 : index
    %107 = vector.load %arg4[%c8, %c0_39] : memref<13x32xf32, #tpu.memory_space<vmem>>, vector<1x32xf32>
    %cst_40 = arith.constant dense<0.000000e+00> : vector<32xf32>
    %108 = vector.multi_reduction <add>, %105, %cst_40 [1] : vector<32x32xf32> to vector<32xf32>
    %109 = vector.shape_cast %108 : vector<32xf32> to vector<32x1xf32>
    %cst_41 = arith.constant 3.200000e+01 : f32
    %110 = vector.broadcast %cst_41 : f32 to vector<32x1xf32>
    %111 = arith.divf %109, %110 : vector<32x1xf32>
    %112 = vector.broadcast %111 : vector<32x1xf32> to vector<32x32xf32>
    %113 = arith.subf %105, %112 : vector<32x32xf32>
    %114 = vector.broadcast %111 : vector<32x1xf32> to vector<32x32xf32>
    %115 = arith.subf %105, %114 : vector<32x32xf32>
    %116 = arith.mulf %113, %115 : vector<32x32xf32>
    %cst_42 = arith.constant dense<0.000000e+00> : vector<32xf32>
    %117 = vector.multi_reduction <add>, %116, %cst_42 [1] : vector<32x32xf32> to vector<32xf32>
    %118 = vector.shape_cast %117 : vector<32xf32> to vector<32x1xf32>
    %cst_43 = arith.constant 3.200000e+01 : f32
    %119 = vector.broadcast %cst_43 : f32 to vector<32x1xf32>
    %120 = arith.divf %118, %119 : vector<32x1xf32>
    %121 = vector.broadcast %111 : vector<32x1xf32> to vector<32x32xf32>
    %122 = arith.subf %105, %121 : vector<32x32xf32>
    %cst_44 = arith.constant 9.99999974E-6 : f32
    %123 = vector.broadcast %cst_44 : f32 to vector<32x1xf32>
    %124 = arith.addf %120, %123 : vector<32x1xf32>
    %125 = math.rsqrt %124 : vector<32x1xf32>
    %126 = vector.broadcast %125 : vector<32x1xf32> to vector<32x32xf32>
    %127 = arith.mulf %122, %126 : vector<32x32xf32>
    %128 = vector.broadcast %106 : vector<1x32xf32> to vector<32x32xf32>
    %129 = arith.mulf %127, %128 : vector<32x32xf32>
    %130 = vector.broadcast %107 : vector<1x32xf32> to vector<32x32xf32>
    %131 = arith.addf %129, %130 : vector<32x32xf32>
    %cst_45 = arith.constant 0.000000e+00 : f32
    %132 = vector.broadcast %cst_45 : f32 to vector<32x32xf32>
    %133 = arith.cmpf ogt, %131, %132 : vector<32x32xf32>
    %134 = math.exp %131 : vector<32x32xf32>
    %cst_46 = arith.constant 1.000000e+00 : f32
    %135 = vector.broadcast %cst_46 : f32 to vector<32x32xf32>
    %136 = arith.subf %134, %135 : vector<32x32xf32>
    %cst_47 = arith.constant 1.67326319 : f32
    %137 = vector.broadcast %cst_47 : f32 to vector<32x32xf32>
    %138 = arith.mulf %137, %136 : vector<32x32xf32>
    %139 = arith.select %133, %131, %138 : vector<32x32xi1>, vector<32x32xf32>
    %cst_48 = arith.constant 1.05070102 : f32
    %140 = vector.broadcast %cst_48 : f32 to vector<32x32xf32>
    %141 = arith.mulf %140, %139 : vector<32x32xf32>
    %c96 = arith.constant 96 : index
    %c0_49 = arith.constant 0 : index
    %142 = vector.load %arg3[%c96, %c0_49] : memref<160x32xf32, #tpu.memory_space<vmem>>, vector<32x32xf32>
    %cst_50 = arith.constant dense<0.000000e+00> : vector<32x32xf32>
    %143 = tpu.matmul %141, %142, %cst_50 {dimension_numbers = #tpu.dot_dimension_numbers<[1], [0], [0], [1], [0, 0, 1, 1], [], []>} : vector<32x32xf32>, vector<32x32xf32>, vector<32x32xf32> -> vector<32x32xf32>
    %c9 = arith.constant 9 : index
    %c0_51 = arith.constant 0 : index
    %144 = vector.load %arg4[%c9, %c0_51] : memref<13x32xf32, #tpu.memory_space<vmem>>, vector<1x32xf32>
    %145 = vector.broadcast %144 : vector<1x32xf32> to vector<32x32xf32>
    %146 = arith.addf %143, %145 : vector<32x32xf32>
    %c10 = arith.constant 10 : index
    %c0_52 = arith.constant 0 : index
    %147 = vector.load %arg4[%c10, %c0_52] : memref<13x32xf32, #tpu.memory_space<vmem>>, vector<1x32xf32>
    %c11 = arith.constant 11 : index
    %c0_53 = arith.constant 0 : index
    %148 = vector.load %arg4[%c11, %c0_53] : memref<13x32xf32, #tpu.memory_space<vmem>>, vector<1x32xf32>
    %cst_54 = arith.constant dense<0.000000e+00> : vector<32xf32>
    %149 = vector.multi_reduction <add>, %146, %cst_54 [1] : vector<32x32xf32> to vector<32xf32>
    %150 = vector.shape_cast %149 : vector<32xf32> to vector<32x1xf32>
    %cst_55 = arith.constant 3.200000e+01 : f32
    %151 = vector.broadcast %cst_55 : f32 to vector<32x1xf32>
    %152 = arith.divf %150, %151 : vector<32x1xf32>
    %153 = vector.broadcast %152 : vector<32x1xf32> to vector<32x32xf32>
    %154 = arith.subf %146, %153 : vector<32x32xf32>
    %155 = vector.broadcast %152 : vector<32x1xf32> to vector<32x32xf32>
    %156 = arith.subf %146, %155 : vector<32x32xf32>
    %157 = arith.mulf %154, %156 : vector<32x32xf32>
    %cst_56 = arith.constant dense<0.000000e+00> : vector<32xf32>
    %158 = vector.multi_reduction <add>, %157, %cst_56 [1] : vector<32x32xf32> to vector<32xf32>
    %159 = vector.shape_cast %158 : vector<32xf32> to vector<32x1xf32>
    %cst_57 = arith.constant 3.200000e+01 : f32
    %160 = vector.broadcast %cst_57 : f32 to vector<32x1xf32>
    %161 = arith.divf %159, %160 : vector<32x1xf32>
    %162 = vector.broadcast %152 : vector<32x1xf32> to vector<32x32xf32>
    %163 = arith.subf %146, %162 : vector<32x32xf32>
    %cst_58 = arith.constant 9.99999974E-6 : f32
    %164 = vector.broadcast %cst_58 : f32 to vector<32x1xf32>
    %165 = arith.addf %161, %164 : vector<32x1xf32>
    %166 = math.rsqrt %165 : vector<32x1xf32>
    %167 = vector.broadcast %166 : vector<32x1xf32> to vector<32x32xf32>
    %168 = arith.mulf %163, %167 : vector<32x32xf32>
    %169 = vector.broadcast %147 : vector<1x32xf32> to vector<32x32xf32>
    %170 = arith.mulf %168, %169 : vector<32x32xf32>
    %171 = vector.broadcast %148 : vector<1x32xf32> to vector<32x32xf32>
    %172 = arith.addf %170, %171 : vector<32x32xf32>
    %cst_59 = arith.constant 0.000000e+00 : f32
    %173 = vector.broadcast %cst_59 : f32 to vector<32x32xf32>
    %174 = arith.cmpf ogt, %172, %173 : vector<32x32xf32>
    %175 = math.exp %172 : vector<32x32xf32>
    %cst_60 = arith.constant 1.000000e+00 : f32
    %176 = vector.broadcast %cst_60 : f32 to vector<32x32xf32>
    %177 = arith.subf %175, %176 : vector<32x32xf32>
    %cst_61 = arith.constant 1.67326319 : f32
    %178 = vector.broadcast %cst_61 : f32 to vector<32x32xf32>
    %179 = arith.mulf %178, %177 : vector<32x32xf32>
    %180 = arith.select %174, %172, %179 : vector<32x32xi1>, vector<32x32xf32>
    %cst_62 = arith.constant 1.05070102 : f32
    %181 = vector.broadcast %cst_62 : f32 to vector<32x32xf32>
    %182 = arith.mulf %181, %180 : vector<32x32xf32>
    %c128 = arith.constant 128 : index
    %c0_63 = arith.constant 0 : index
    %183 = vector.load %arg3[%c128, %c0_63] : memref<160x32xf32, #tpu.memory_space<vmem>>, vector<32x16xf32>
    %cst_64 = arith.constant dense<0.000000e+00> : vector<32x16xf32>
    %184 = tpu.matmul %182, %183, %cst_64 {dimension_numbers = #tpu.dot_dimension_numbers<[1], [0], [0], [1], [0, 0, 1, 1], [], []>} : vector<32x32xf32>, vector<32x16xf32>, vector<32x16xf32> -> vector<32x16xf32>
    %c12 = arith.constant 12 : index
    %c0_65 = arith.constant 0 : index
    %185 = vector.load %arg4[%c12, %c0_65] : memref<13x32xf32, #tpu.memory_space<vmem>>, vector<1x16xf32>
    %186 = vector.broadcast %185 : vector<1x16xf32> to vector<32x16xf32>
    %187 = arith.addf %184, %186 : vector<32x16xf32>
    %c0_66 = arith.constant 0 : index
    %c0_67 = arith.constant 0 : index
    %188 = vector.load %arg5[%c0_66, %c0_67] : memref<32x16xf32, #tpu.memory_space<vmem>>, vector<32x16xf32>
    tpu.vector_store %arg5[%c0_66, %c0_67], %187 {strides = array<i32>} : memref<32x16xf32, #tpu.memory_space<vmem>>, vector<32x16xf32>,
    return
  }
  func.func @transform_0(%arg0: i32) -> (i32, i32) {
    %c0_i32 = arith.constant 0 : i32
    %c0_i32_0 = arith.constant 0 : i32
    return %arg0, %c0_i32 : i32, i32
  }
  func.func @transform_1(%arg0: i32) -> (i32, i32) {
    %c0_i32 = arith.constant 0 : i32
    %c0_i32_0 = arith.constant 0 : i32
    return %arg0, %c0_i32 : i32, i32
  }
  func.func @transform_2(%arg0: i32) -> (i32, i32) {
    %c0_i32 = arith.constant 0 : i32
    %c0_i32_0 = arith.constant 0 : i32
    %c0_i32_1 = arith.constant 0 : i32
    return %c0_i32, %c0_i32_0 : i32, i32
  }
  func.func @transform_3(%arg0: i32) -> (i32, i32) {
    %c0_i32 = arith.constant 0 : i32
    %c0_i32_0 = arith.constant 0 : i32
    %c0_i32_1 = arith.constant 0 : i32
    return %c0_i32, %c0_i32_0 : i32, i32
  }
  func.func @transform_4(%arg0: i32) -> (i32, i32) {
    %c0_i32 = arith.constant 0 : i32
    %c0_i32_0 = arith.constant 0 : i32
    return %arg0, %c0_i32 : i32, i32
  }
}

</mosaic_0001>

<llo_original>
// kernel: tpu_custom_call.1
$region0: #{tpu_custom_call.1}
  #allocation0 [shape = 'u32[]', space=smem, size = 0x4, offset = 0x4, fixed_abs, tag = 'smem constant byte address 0x4 - core index']
  #allocation1 [shape = 'u32[144,128]{1,0:T(1,128)}', space=vmem, size = 0x12000, scoped, tag = 'internal scratch']
  %s0 = inlined_call_operand.vmem [shape: s32[64,2], index: 0, kind: input, shape index: {}]
  %s1 = inlined_call_operand.vmem [shape: f32[64,16], index: 1, kind: input, shape index: {}]
  %s2 = inlined_call_operand.vmem [shape: f32[160,32], index: 2, kind: input, shape index: {}]
  %s3 = inlined_call_operand.vmem [shape: f32[13,32], index: 3, kind: input, shape index: {}]
  %s4 = inlined_call_operand.vmem [shape: f32[64,16], index: 4, kind: output, shape index: {}]
  %s5 = sld [smem:[#allocation0]]
  $region49: #{tpu_custom_call.1} parent=0
    _
  %s7 = ssub.s32 1, %s5
  %s8 = scalar_select 0, %s7, %s5
  loop: start=0, step=1, limit=4
  $region2: #{tpu_custom_call.1} parent=0 // loop_pre_header
    _
  $region3: #{tpu_custom_call.1} parent=0 // loop_header
    %s10 = sphi 0, %s14
    %p11 = scmp.ge.s32.totalorder %s10, 4
    %s20 = sphi 0, %s22
    %s23 = sphi 0, %s20
    %s24 = sphi 0, %s23
    %s40 = sphi 0, %s24
    %s46 = sphi 0, %s48
    %s49 = sphi 0, %s46
    %s50 = sphi 0, %s49
    %s66 = sphi 0, %s50
    %s70 = sphi 0, %s70
    %s72 = sphi 0, %s70
    %s73 = sphi 0, %s72
    %s87 = sphi 0, %s73
    %s91 = sphi 0, %s91
    %s93 = sphi 0, %s91
    %s94 = sphi 0, %s93
    %s108 = sphi 0, %s94
    %s114 = sphi 0, %s116
    %s117 = sphi 0, %s114
    %s118 = sphi 0, %s117
    %s134 = sphi 0, %s118
  $region4: #{tpu_custom_call.1} parent=0 // loop_header_branch
    %13 = sbr.rel (%p11) target = $region8
  $region5: #{tpu_custom_call.1} parent=0 // loop_body
    %s15 = ssub.s32 %s10, 1
    %s16 = ssub.s32 %s10, 2
    %s17 = sadd.s32 %s10, 1
    %s18 = ssub.s32 %s10, %s17
    %p19 = scmp.eq.s32.totalorder %s18, 0
    %s21 = sadd.s32 %s20, 1
    %s22 = scalar_select %p19, %s20, %s21
    %p25 = pneg %p19
    %p26 = scmp.eq.s32.totalorder %s10, 1
    %p27 = por %p25, %p26
    %p28 = scmp.ne.s32.totalorder %s20, %s23
    %p29 = scmp.eq.s32.totalorder %s10, 0
    %p30 = por %p28, %p29
    %p31 = scmp.ne.s32.totalorder %s20, %s23
    %p32 = scmp.eq.s32.totalorder %s15, 1
    %p33 = por %p31, %p32
    %p34 = scmp.ne.s32.totalorder %s23, %s24
    %p35 = scmp.eq.s32.totalorder %s15, 0
    %p36 = por %p34, %p35
    %p37 = scmp.ne.s32.totalorder %s23, %s24
    %p38 = scmp.eq.s32.totalorder %s16, 1
    %p39 = por %p37, %p38
    %p41 = scmp.ne.s32.totalorder %s24, %s40
    %p42 = scmp.eq.s32.totalorder %s16, 0
    %p43 = por %p41, %p42
    %s44 = ssub.s32 %s10, %s17
    %p45 = scmp.eq.s32.totalorder %s44, 0
    %s47 = sadd.s32 %s46, 1
    %s48 = scalar_select %p45, %s46, %s47
    %p51 = pneg %p45
    %p52 = scmp.eq.s32.totalorder %s10, 1
    %p53 = por %p51, %p52
    %p54 = scmp.ne.s32.totalorder %s46, %s49
    %p55 = scmp.eq.s32.totalorder %s10, 0
    %p56 = por %p54, %p55
    %p57 = scmp.ne.s32.totalorder %s46, %s49
    %p58 = scmp.eq.s32.totalorder %s15, 1
    %p59 = por %p57, %p58
    %p60 = scmp.ne.s32.totalorder %s49, %s50
    %p61 = scmp.eq.s32.totalorder %s15, 0
    %p62 = por %p60, %p61
    %p63 = scmp.ne.s32.totalorder %s49, %s50
    %p64 = scmp.eq.s32.totalorder %s16, 1
    %p65 = por %p63, %p64
    %p67 = scmp.ne.s32.totalorder %s50, %s66
    %p68 = scmp.eq.s32.totalorder %s16, 0
    %p69 = por %p67, %p68
    %s71 = sadd.s32 %s70, 1
    %p74 = scmp.eq.s32.totalorder %s10, 1
    %p75 = scmp.ne.s32.totalorder %s70, %s72
    %p76 = scmp.eq.s32.totalorder %s10, 0
    %p77 = por %p75, %p76
    %p78 = scmp.ne.s32.totalorder %s70, %s72
    %p79 = scmp.eq.s32.totalorder %s15, 1
    %p80 = por %p78, %p79
    %p81 = scmp.ne.s32.totalorder %s72, %s73
    %p82 = scmp.eq.s32.totalorder %s15, 0
    %p83 = por %p81, %p82
    %p84 = scmp.ne.s32.totalorder %s72, %s73
    %p85 = scmp.eq.s32.totalorder %s16, 1
    %p86 = por %p84, %p85
    %p88 = scmp.ne.s32.totalorder %s73, %s87
    %p89 = scmp.eq.s32.totalorder %s16, 0
    %p90 = por %p88, %p89
    %s92 = sadd.s32 %s91, 1
    %p95 = scmp.eq.s32.totalorder %s10, 1
    %p96 = scmp.ne.s32.totalorder %s91, %s93
    %p97 = scmp.eq.s32.totalorder %s10, 0
    %p98 = por %p96, %p97
    %p99 = scmp.ne.s32.totalorder %s91, %s93
    %p100 = scmp.eq.s32.totalorder %s15, 1
    %p101 = por %p99, %p100
    %p102 = scmp.ne.s32.totalorder %s93, %s94
    %p103 = scmp.eq.s32.totalorder %s15, 0
    %p104 = por %p102, %p103
    %p105 = scmp.ne.s32.totalorder %s93, %s94
    %p106 = scmp.eq.s32.totalorder %s16, 1
    %p107 = por %p105, %p106
    %p109 = scmp.ne.s32.totalorder %s94, %s108
    %p110 = scmp.eq.s32.totalorder %s16, 0
    %p111 = por %p109, %p110
    %s112 = ssub.s32 %s10, %s17
    %p113 = scmp.eq.s32.totalorder %s112, 0
    %s115 = sadd.s32 %s114, 1
    %s116 = scalar_select %p113, %s114, %s115
    %p119 = pneg %p113
    %p120 = scmp.eq.s32.totalorder %s10, 1
    %p121 = por %p119, %p120
    %p122 = scmp.ne.s32.totalorder %s114, %s117
    %p123 = scmp.eq.s32.totalorder %s10, 0
    %p124 = por %p122, %p123
    %p125 = scmp.ne.s32.totalorder %s114, %s117
    %p126 = scmp.eq.s32.totalorder %s15, 1
    %p127 = por %p125, %p126
    %p128 = scmp.ne.s32.totalorder %s117, %s118
    %p129 = scmp.eq.s32.totalorder %s15, 0
    %p130 = por %p128, %p129
    %p131 = scmp.ne.s32.totalorder %s117, %s118
    %p132 = scmp.eq.s32.totalorder %s16, 1
    %p133 = por %p131, %p132
    %p135 = scmp.ne.s32.totalorder %s118, %s134
    %p136 = scmp.eq.s32.totalorder %s16, 0
    %p137 = por %p135, %p136
    %p138 = scmp.le.s32.totalorder 1, %s10
    %p139 = scmp.lt.s32.totalorder %s10, 3
    %p140 = pnand %p138, %p139
    %p141 = pneg %p140
    // Predicated region
    $region9: #{tpu_custom_call.1} parent=5 // pred_check
      _
    $region10: #{tpu_custom_call.1} parent=5 // pred_check_branch
      %143 = sbr.rel (%p140) target = $region12
    $region11: #{tpu_custom_call.1} parent=5 // pred_region
      %s144 = ssub.s32 %s10, 1
      // Predicated region
      $region13: #{tpu_custom_call.1} parent=11 // pred_check
        %p145 = pneg %p83
      $region14: #{tpu_custom_call.1} parent=11 // pred_check_branch
        %147 = sbr.rel (%p145) target = $region16
      $region15: #{tpu_custom_call.1} parent=11 // pred_region
        _
      $region16: #{tpu_custom_call.1} parent=11 // pred_fallthru
        _
      // Predicated region
      $region17: #{tpu_custom_call.1} parent=11 // pred_check
        %p148 = pneg %p104
      $region18: #{tpu_custom_call.1} parent=11 // pred_check_branch
        %150 = sbr.rel (%p148) target = $region20
      $region19: #{tpu_custom_call.1} parent=11 // pred_region
        _
      $region20: #{tpu_custom_call.1} parent=11 // pred_fallthru
        _
    $region12: #{tpu_custom_call.1} parent=5 // pred_fallthru
      _
    %p151 = scmp.lt.s32.totalorder %s10, 2
    // Predicated region
    $region21: #{tpu_custom_call.1} parent=5 // pred_check
      %p152 = pneg %p151
    $region22: #{tpu_custom_call.1} parent=5 // pred_check_branch
      %154 = sbr.rel (%p152) target = $region24
    $region23: #{tpu_custom_call.1} parent=5 // pred_region
      // Predicated region
      $region25: #{tpu_custom_call.1} parent=23 // pred_check
        %p155 = pneg %p30
      $region26: #{tpu_custom_call.1} parent=23 // pred_check_branch
        %157 = sbr.rel (%p155) target = $region28
      $region27: #{tpu_custom_call.1} parent=23 // pred_region
        %s158 = smul.u32 4, %s10
        %p159 = scmp.lt.s32.totalorder %s158, 7
        %s160 = scalar_select %p159, %s158, 7
        %s161 = smul.addr %s160, 8
        %s162 = scalar_lea.vmem %s0, %s161
        %s163 = smul.u32 4, %s10
      $region28: #{tpu_custom_call.1} parent=23 // pred_fallthru
        _
      // Predicated region
      $region29: #{tpu_custom_call.1} parent=23 // pred_check
        %p164 = pneg %p56
      $region30: #{tpu_custom_call.1} parent=23 // pred_check_branch
        %166 = sbr.rel (%p164) target = $region32
      $region31: #{tpu_custom_call.1} parent=23 // pred_region
        %s167 = smul.u32 4, %s10
        %p168 = scmp.lt.s32.totalorder %s167, 7
        %s169 = scalar_select %p168, %s167, 7
        %s170 = smul.addr %s169, 8
        %s171 = scalar_lea.vmem %s1, %s170
        %s172 = smul.u32 4, %s10
      $region32: #{tpu_custom_call.1} parent=23 // pred_fallthru
        _
    $region24: #{tpu_custom_call.1} parent=5 // pred_fallthru
      _
    %p173 = scmp.le.s32.totalorder 1, %s10
    %p174 = scmp.lt.s32.totalorder %s10, 3
    %p175 = pnand %p173, %p174
    %p176 = pneg %p175
    // Predicated region
    $region33: #{tpu_custom_call.1} parent=5 // pred_check
      _
    $region34: #{tpu_custom_call.1} parent=5 // pred_check_branch
      %178 = sbr.rel (%p175) target = $region36
    $region35: #{tpu_custom_call.1} parent=5 // pred_region
      %s179 = ssub.s32 %s10, 1
      %s180 = smul.u32 4, %s15
      %p181 = scmp.lt.s32.totalorder %s180, 7
      %s182 = scalar_select %p181, %s180, 7
      %s183 = smul.addr %s182, 8
      %s184 = scalar_lea.vmem %s0, %s183
      %p185 = pneg %p36
      %p186 = pneg %p33
      %s187 = smul.u32 4, %s15
      %p188 = scmp.lt.s32.totalorder %s187, 7
      %s189 = scalar_select %p188, %s187, 7
      %s190 = smul.addr %s189, 8
      %s191 = scalar_lea.vmem %s1, %s190
      %p192 = pneg %p62
      %p193 = pneg %p59
      %p194 = pneg %p83
      %p195 = pneg %p80
      %p196 = pneg %p104
      %p197 = pneg %p101
      %p198 = pneg %p130
      %p199 = pneg %p127
      %s200 = smul.u32 4, %s15
      %p201 = scmp.lt.s32.totalorder %s200, 7
      %s202 = scalar_select %p201, %s200, 7
      %s203 = smul.addr %s202, 8
      %s204 = scalar_lea.vmem %s4, %s203
      %s205 = smul.u32 4, %s15
      %p206 = scmp.lt.s32.totalorder %s205, 7
      %s207 = scalar_select %p206, %s205, 7
      %s208 = smul.addr %s207, 8
      %s209 = scalar_lea.vmem %s0, %s208
      %s210 = smul.u32 4, %s15
      %s211 = smul.u32 4, %s15
      %p212 = scmp.lt.s32.totalorder %s211, 7
      %s213 = scalar_select %p212, %s211, 7
      %s214 = smul.addr %s213, 8
      %s215 = scalar_lea.vmem %s1, %s214
      %s216 = smul.u32 4, %s15
      %s217 = smul.u32 4, %s15
      %p218 = scmp.lt.s32.totalorder %s217, 7
      %s219 = scalar_select %p218, %s217, 7
      %s220 = smul.addr %s219, 8
      %s221 = scalar_lea.vmem %s4, %s220
      %s222 = smul.u32 4, %s15
      %v223 = vld [vmem:[%s209] sm:$0xff]
      %v224 = vld [vmem:[%s209 + $0x8] sm:$0xff]
      %v225 = vld [vmem:[%s209 + $0x10] sm:$0xff]
      %v226 = vld [vmem:[%s209 + $0x18] sm:$0xff]
      %v227 = vlaneseq
      %v228 = vand.u32 %v227, 127
      %229 = vset.pattern.permute.xlu0 0
      %230 = vperm.xlu0 %229, %v223
      %v231 = vpop.permute.xlu0 %230
      %232 = vset.pattern.permute.xlu0 0
      %233 = vperm.xlu0 %232, %v224
      %v234 = vpop.permute.xlu0 %233
      %235 = vset.pattern.permute.xlu0 0
      %236 = vperm.xlu0 %235, %v225
      %v237 = vpop.permute.xlu0 %236
      %238 = vset.pattern.permute.xlu0 0
      %239 = vperm.xlu0 %238, %v226
      %v240 = vpop.permute.xlu0 %239
      %vm241 = vcmp.eq.s32.totalorder %v228, %v231
      %vm242 = vcmp.eq.s32.totalorder %v228, %v234
      %vm243 = vcmp.eq.s32.totalorder %v228, %v237
      %vm244 = vcmp.eq.s32.totalorder %v228, %v240
      %v245 = vsel %vm241, 1, 0
      %v246 = vsel %vm242, 1, 0
      %v247 = vsel %vm243, 1, 0
      %v248 = vsel %vm244, 1, 0
      %v249 = vcvt.s32.f32 %v245
      %v250 = vcvt.s32.f32 %v246
      %v251 = vcvt.s32.f32 %v247
      %v252 = vcvt.s32.f32 %v248
      %v253 = vadd.f32 %v249, 0.0
      %v254 = vadd.f32 %v250, 0.0
      %v255 = vadd.f32 %v251, 0.0
      %v256 = vadd.f32 %v252, 0.0
      %257 = vset.pattern.permute.xlu0 1
      %258 = vperm.xlu0 %257, %v223
      %v259 = vpop.permute.xlu0 %258
      %260 = vset.pattern.permute.xlu0 1
      %261 = vperm.xlu0 %260, %v224
      %v262 = vpop.permute.xlu0 %261
      %263 = vset.pattern.permute.xlu0 1
      %264 = vperm.xlu0 %263, %v225
      %v265 = vpop.permute.xlu0 %264
      %266 = vset.pattern.permute.xlu0 1
      %267 = vperm.xlu0 %266, %v226
      %v268 = vpop.permute.xlu0 %267
      %vm269 = vcmp.eq.s32.totalorder %v228, %v259
      %vm270 = vcmp.eq.s32.totalorder %v228, %v262
      %vm271 = vcmp.eq.s32.totalorder %v228, %v265
      %vm272 = vcmp.eq.s32.totalorder %v228, %v268
      %v273 = vsel %vm269, 1, 0
      %v274 = vsel %vm270, 1, 0
      %v275 = vsel %vm271, 1, 0
      %v276 = vsel %vm272, 1, 0
      %v277 = vcvt.s32.f32 %v273
      %v278 = vcvt.s32.f32 %v274
      %v279 = vcvt.s32.f32 %v275
      %v280 = vcvt.s32.f32 %v276
      %v281 = vadd.f32 %v253, %v277
      %v282 = vadd.f32 %v254, %v278
      %v283 = vadd.f32 %v255, %v279
      %v284 = vadd.f32 %v256, %v280
      %v285 = vld [vmem:[%s215] sm:$0xff]
      %v286 = vld [vmem:[%s215 + $0x8] sm:$0xff]
      %v287 = vld [vmem:[%s215 + $0x10] sm:$0xff]
      %v288 = vld [vmem:[%s215 + $0x18] sm:$0xff]
      %v289 = vld [vmem:[%s2] sm:$0xff]
      %v290 = vld [vmem:[%s2 + $0x8] sm:$0xff]
      %v291 = vld [vmem:[%s3] sm:$0x1]
      %v292 = vlaneseq
      %v293 = vshrl.u32 %v292, 7
      %v294 = vsub.s32 0, %v293
      %v295 = vrot.slane %v291, %v294
      %vm296 = vcmask 130048
      %v298 = vsel %vm296, %v285, 0
      %v301 = vsel %vm296, %v286, 0
      %v304 = vsel %vm296, %v287, 0
      %v307 = vsel %vm296, %v288, 0
      %309 = vmatprep.subr.mxu0 0.0
      %310 = vmatpush1.msra.mxu0 %v289
      %311 = vmatprep.subr.mxu0 0.0
      %312 = vmatpush1.msra.mxu0 %v290
      %313 = vmatprep.subr.mxu0 0.0
      %314 = vmatpush1.msra.mxu0 0.0
      %315 = vmatprep.subr.mxu0 0.0
      %316 = vmatpush1.msra.mxu0 0.0
      %317 = vmatprep.subr.mxu0 0.0
      %318 = vmatpush1.msra.mxu0 0.0
      %319 = vmatprep.subr.mxu0 0.0
      %320 = vmatpush1.msra.mxu0 0.0
      %321 = vmatprep.subr.mxu0 0.0
      %322 = vmatpush1.msra.mxu0 0.0
      %323 = vmatprep.subr.mxu0 0.0
      %324 = vmatpush1.msra.mxu0 0.0
      %325 = vmatprep.subr.mxu0 0.0
      %326 = vmatpush1.msra.mxu0 0.0
      %327 = vmatprep.subr.mxu0 0.0
      %328 = vmatpush1.msra.mxu0 0.0
      %329 = vmatprep.subr.mxu0 0.0
      %330 = vmatpush1.msra.mxu0 0.0
      %331 = vmatprep.subr.mxu0 0.0
      %332 = vmatpush1.msra.mxu0 0.0
      %333 = vmatprep.subr.mxu0 0.0
      %334 = vmatpush1.msra.mxu0 0.0
      %335 = vmatprep.subr.mxu0 0.0
      %336 = vmatpush1.msra.mxu0 0.0
      %337 = vmatprep.subr.mxu0 0.0
      %338 = vmatpush1.msra.mxu0 0.0
      %339 = vmatprep.subr.mxu0 0.0
      %340 = vmatpush1.msra.mxu0 0.0
      %341 = vmatprep.subr.mxu0 0.0
      %342 = vmatpush1.msra.mxu0 0.0
      %343 = vmatprep.subr.mxu0 0.0
      %344 = vmatpush1.msra.mxu0 0.0
      %345 = vmatprep.subr.mxu0 0.0
      %346 = vmatpush1.msra.mxu0 0.0
      %347 = vmatprep.subr.mxu0 0.0
      %348 = vmatpush1.msra.mxu0 0.0
      %349 = vmatprep.subr.mxu0 0.0
      %350 = vmatpush1.msra.mxu0 0.0
      %351 = vmatprep.subr.mxu0 0.0
      %352 = vmatpush1.msra.mxu0 0.0
      %353 = vmatprep.subr.mxu0 0.0
      %354 = vmatpush1.msra.mxu0 0.0
      %355 = vmatprep.subr.mxu0 0.0
      %356 = vmatpush1.msra.mxu0 0.0
      %357 = vmatprep.subr.mxu0 0.0
      %358 = vmatpush1.msra.mxu0 0.0
      %359 = vmatprep.subr.mxu0 0.0
      %360 = vmatpush1.msra.mxu0 0.0
      %361 = vmatprep.subr.mxu0 0.0
      %362 = vmatpush1.msra.mxu0 0.0
      %363 = vmatprep.subr.mxu0 0.0
      %364 = vmatpush1.msra.mxu0 0.0
      %365 = vmatprep.subr.mxu0 0.0
      %366 = vmatpush1.msra.mxu0 0.0
      %367 = vmatprep.subr.mxu0 0.0
      %368 = vmatpush1.msra.mxu0 0.0
      %369 = vmatprep.subr.mxu0 0.0
      %370 = vmatpush1.msra.mxu0 0.0
      %371 = vmatprep.subr.mxu0 0.0
      %372 = vmatpush1.msra.mxu0 0.0
      %373 = vmatprep.mubr.f32.mxu0 0.0
      %374 = vmatmul.mubr.f32.gmra.mrb[0].mxu0 %v298
      %v375 = vpop.f32.mrb[0].mxu0
      %v376 = vadd.f32 %v295, %v375
      %v377 = vpop.f32.mrb[0].mxu0
      %378 = vmatprep.mubr.f32.mxu0 0.0
      %379 = vmatmul.mubr.f32.gmra.mrb[0].mxu0 %v301
      %v380 = vpop.f32.mrb[0].mxu0
      %v381 = vadd.f32 %v295, %v380
      %v382 = vpop.f32.mrb[0].mxu0
      %383 = vmatprep.mubr.f32.mxu0 0.0
      %384 = vmatmul.mubr.f32.gmra.mrb[0].mxu0 %v304
      %v385 = vpop.f32.mrb[0].mxu0
      %v386 = vadd.f32 %v295, %v385
      %v387 = vpop.f32.mrb[0].mxu0
      %388 = vmatprep.mubr.f32.mxu0 0.0
      %389 = vmatmul.mubr.f32.gmra.mrb[0].mxu0 %v307
      %v390 = vpop.f32.mrb[0].mxu0
      %v391 = vadd.f32 %v295, %v390
      %v392 = vpop.f32.mrb[0].mxu0
      %393 = vdwg.mxu0
      %v394 = vld [vmem:[%s3 + $0x1] sm:$0x1]
      %v395 = vld [vmem:[%s3 + $0x2] sm:$0x1]
      %vm396 = vcmask 261120
      %v397 = vsel %vm396, %v376, 0.0
      %398 = vadd.xlane.f32.xlu0 %v397
      %v399 = vpop.xlane.xlu0 %398
      %v400 = vsel %vm396, %v381, 0.0
      %401 = vadd.xlane.f32.xlu0 %v400
      %v402 = vpop.xlane.xlu0 %401
      %v403 = vsel %vm396, %v386, 0.0
      %404 = vadd.xlane.f32.xlu0 %v403
      %v405 = vpop.xlane.xlu0 %404
      %v406 = vsel %vm396, %v391, 0.0
      %407 = vadd.xlane.f32.xlu0 %v406
      %v408 = vpop.xlane.xlu0 %407
      %v409 = vrcp.pop 32.0
      %v410 = vmul.f32 %v399, %v409
      %v411 = vmul.f32 %v402, %v409
      %v412 = vmul.f32 %v405, %v409
      %v413 = vmul.f32 %v408, %v409
      %v414 = vsub.f32 %v376, %v410
      %v415 = vsub.f32 %v381, %v411
      %v416 = vsub.f32 %v386, %v412
      %v417 = vsub.f32 %v391, %v413
      %v418 = vmul.f32 %v414, %v414
      %v419 = vmul.f32 %v415, %v415
      %v420 = vmul.f32 %v416, %v416
      %v421 = vmul.f32 %v417, %v417
      %v422 = vsel %vm396, %v418, 0.0
      %423 = vadd.xlane.f32.xlu0 %v422
      %v424 = vpop.xlane.xlu0 %423
      %v425 = vsel %vm396, %v419, 0.0
      %426 = vadd.xlane.f32.xlu0 %v425
      %v427 = vpop.xlane.xlu0 %426
      %v428 = vsel %vm396, %v420, 0.0
      %429 = vadd.xlane.f32.xlu0 %v428
      %v430 = vpop.xlane.xlu0 %429
      %v431 = vsel %vm396, %v421, 0.0
      %432 = vadd.xlane.f32.xlu0 %v431
      %v433 = vpop.xlane.xlu0 %432
      %v434 = vmul.f32 %v424, %v409
      %v435 = vmul.f32 %v427, %v409
      %v436 = vmul.f32 %v430, %v409
      %v437 = vmul.f32 %v433, %v409
      %v438 = vadd.f32 %v434, 1e-05
      %v439 = vadd.f32 %v435, 1e-05
      %v440 = vadd.f32 %v436, 1e-05
      %v441 = vadd.f32 %v437, 1e-05
      %v442 = vrsqrt.pop %v438
      %v443 = vrsqrt.pop %v439
      %v444 = vrsqrt.pop %v440
      %v445 = vrsqrt.pop %v441
      %v446 = vmul.f32 %v414, %v442
      %v447 = vmul.f32 %v415, %v443
      %v448 = vmul.f32 %v416, %v444
      %v449 = vmul.f32 %v417, %v445
      %v450 = vlaneseq
      %v451 = vshrl.u32 %v450, 7
      %v452 = vsub.s32 0, %v451
      %v453 = vrot.slane %v394, %v452
      %v454 = vmul.f32 %v446, %v453
      %v455 = vmul.f32 %v447, %v453
      %v456 = vmul.f32 %v448, %v453
      %v457 = vmul.f32 %v449, %v453
      %v458 = vlaneseq
      %v459 = vshrl.u32 %v458, 7
      %v460 = vsub.s32 0, %v459
      %v461 = vrot.slane %v395, %v460
      %v462 = vadd.f32 %v454, %v461
      %v463 = vadd.f32 %v455, %v461
      %v464 = vadd.f32 %v456, %v461
      %v465 = vadd.f32 %v457, %v461
      %vm466 = vcmp.gt.f32.partialorder %v462, 0.0
      %vm467 = vcmp.gt.f32.partialorder %v463, 0.0
      %vm468 = vcmp.gt.f32.partialorder %v464, 0.0
      %vm469 = vcmp.gt.f32.partialorder %v465, 0.0
      %v470 = vmul.f32 %v462, 1.442695
      %v471 = vpow.pop %v470
      %v472 = vmul.f32 %v463, 1.442695
      %v473 = vpow.pop %v472
      %v474 = vmul.f32 %v464, 1.442695
      %v475 = vpow.pop %v474
      %v476 = vmul.f32 %v465, 1.442695
      %v477 = vpow.pop %v476
      %v478 = vsub.f32 %v471, 1.0
      %v479 = vsub.f32 %v473, 1.0
      %v480 = vsub.f32 %v475, 1.0
      %v481 = vsub.f32 %v477, 1.0
      %v482 = vmul.f32 %v478, 1.6732632
      %v483 = vmul.f32 %v479, 1.6732632
      %v484 = vmul.f32 %v480, 1.6732632
      %v485 = vmul.f32 %v481, 1.6732632
      %v486 = vsel %vm466, %v462, %v482
      %v487 = vsel %vm467, %v463, %v483
      %v488 = vsel %vm468, %v464, %v484
      %v489 = vsel %vm469, %v465, %v485
      %v490 = vmul.f32 %v486, 1.050701
      %v491 = vmul.f32 %v487, 1.050701
      %v492 = vmul.f32 %v488, 1.050701
      %v493 = vmul.f32 %v489, 1.050701
      %v494 = vld [vmem:[%s2 + $0x10] sm:$0xff]
      %v495 = vld [vmem:[%s2 + $0x18] sm:$0xff]
      %v496 = vld [vmem:[%s2 + $0x20] sm:$0xff]
      %v497 = vld [vmem:[%s2 + $0x28] sm:$0xff]
      %v498 = vld [vmem:[%s3 + $0x3] sm:$0x1]
      %v499 = vlaneseq
      %v500 = vshrl.u32 %v499, 7
      %v501 = vsub.s32 0, %v500
      %v502 = vrot.slane %v498, %v501
      %v504 = vsel %vm396, %v490, 0
      %v507 = vsel %vm396, %v491, 0
      %v510 = vsel %vm396, %v492, 0
      %v513 = vsel %vm396, %v493, 0
      %515 = vmatprep.subr.mxu0 0.0
      %516 = vmatpush1.msra.mxu0 %v494
      %517 = vmatprep.subr.mxu0 0.0
      %518 = vmatpush1.msra.mxu0 %v495
      %519 = vmatprep.subr.mxu0 0.0
      %520 = vmatpush1.msra.mxu0 %v496
      %521 = vmatprep.subr.mxu0 0.0
      %522 = vmatpush1.msra.mxu0 %v497
      %523 = vmatprep.subr.mxu0 0.0
      %524 = vmatpush1.msra.mxu0 0.0
      %525 = vmatprep.subr.mxu0 0.0
      %526 = vmatpush1.msra.mxu0 0.0
      %527 = vmatprep.subr.mxu0 0.0
      %528 = vmatpush1.msra.mxu0 0.0
      %529 = vmatprep.subr.mxu0 0.0
      %530 = vmatpush1.msra.mxu0 0.0
      %531 = vmatprep.subr.mxu0 0.0
      %532 = vmatpush1.msra.mxu0 0.0
      %533 = vmatprep.subr.mxu0 0.0
      %534 = vmatpush1.msra.mxu0 0.0
      %535 = vmatprep.subr.mxu0 0.0
      %536 = vmatpush1.msra.mxu0 0.0
      %537 = vmatprep.subr.mxu0 0.0
      %538 = vmatpush1.msra.mxu0 0.0
      %539 = vmatprep.subr.mxu0 0.0
      %540 = vmatpush1.msra.mxu0 0.0
      %541 = vmatprep.subr.mxu0 0.0
      %542 = vmatpush1.msra.mxu0 0.0
      %543 = vmatprep.subr.mxu0 0.0
      %544 = vmatpush1.msra.mxu0 0.0
      %545 = vmatprep.subr.mxu0 0.0
      %546 = vmatpush1.msra.mxu0 0.0
      %547 = vmatprep.subr.mxu0 0.0
      %548 = vmatpush1.msra.mxu0 0.0
      %549 = vmatprep.subr.mxu0 0.0
      %550 = vmatpush1.msra.mxu0 0.0
      %551 = vmatprep.subr.mxu0 0.0
      %552 = vmatpush1.msra.mxu0 0.0
      %553 = vmatprep.subr.mxu0 0.0
      %554 = vmatpush1.msra.mxu0 0.0
      %555 = vmatprep.subr.mxu0 0.0
      %556 = vmatpush1.msra.mxu0 0.0
      %557 = vmatprep.subr.mxu0 0.0
      %558 = vmatpush1.msra.mxu0 0.0
      %559 = vmatprep.subr.mxu0 0.0
      %560 = vmatpush1.msra.mxu0 0.0
      %561 = vmatprep.subr.mxu0 0.0
      %562 = vmatpush1.msra.mxu0 0.0
      %563 = vmatprep.subr.mxu0 0.0
      %564 = vmatpush1.msra.mxu0 0.0
      %565 = vmatprep.subr.mxu0 0.0
      %566 = vmatpush1.msra.mxu0 0.0
      %567 = vmatprep.subr.mxu0 0.0
      %568 = vmatpush1.msra.mxu0 0.0
      %569 = vmatprep.subr.mxu0 0.0
      %570 = vmatpush1.msra.mxu0 0.0
      %571 = vmatprep.subr.mxu0 0.0
      %572 = vmatpush1.msra.mxu0 0.0
      %573 = vmatprep.subr.mxu0 0.0
      %574 = vmatpush1.msra.mxu0 0.0
      %575 = vmatprep.subr.mxu0 0.0
      %576 = vmatpush1.msra.mxu0 0.0
      %577 = vmatprep.subr.mxu0 0.0
      %578 = vmatpush1.msra.mxu0 0.0
      %579 = vmatprep.mubr.f32.mxu0 0.0
      %580 = vmatmul.mubr.f32.gmra.mrb[0].mxu0 %v504
      %v581 = vpop.f32.mrb[0].mxu0
      %v582 = vadd.f32 %v502, %v581
      %v583 = vpop.f32.mrb[0].mxu0
      %584 = vmatprep.mubr.f32.mxu0 0.0
      %585 = vmatmul.mubr.f32.gmra.mrb[0].mxu0 %v507
      %v586 = vpop.f32.mrb[0].mxu0
      %v587 = vadd.f32 %v502, %v586
      %v588 = vpop.f32.mrb[0].mxu0
      %589 = vmatprep.mubr.f32.mxu0 0.0
      %590 = vmatmul.mubr.f32.gmra.mrb[0].mxu0 %v510
      %v591 = vpop.f32.mrb[0].mxu0
      %v592 = vadd.f32 %v502, %v591
      %v593 = vpop.f32.mrb[0].mxu0
      %594 = vmatprep.mubr.f32.mxu0 0.0
      %595 = vmatmul.mubr.f32.gmra.mrb[0].mxu0 %v513
      %v596 = vpop.f32.mrb[0].mxu0
      %v597 = vadd.f32 %v502, %v596
      %v598 = vpop.f32.mrb[0].mxu0
      %599 = vdwg.mxu0
      %v600 = vld [vmem:[%s3 + $0x4] sm:$0x1]
      %v601 = vld [vmem:[%s3 + $0x5] sm:$0x1]
      %v602 = vsel %vm396, %v582, 0.0
      %603 = vadd.xlane.f32.xlu0 %v602
      %v604 = vpop.xlane.xlu0 %603
      %v605 = vsel %vm396, %v587, 0.0
      %606 = vadd.xlane.f32.xlu0 %v605
      %v607 = vpop.xlane.xlu0 %606
      %v608 = vsel %vm396, %v592, 0.0
      %609 = vadd.xlane.f32.xlu0 %v608
      %v610 = vpop.xlane.xlu0 %609
      %v611 = vsel %vm396, %v597, 0.0
      %612 = vadd.xlane.f32.xlu0 %v611
      %v613 = vpop.xlane.xlu0 %612
      %v614 = vmul.f32 %v604, %v409
      %v615 = vmul.f32 %v607, %v409
      %v616 = vmul.f32 %v610, %v409
      %v617 = vmul.f32 %v613, %v409
      %v618 = vsub.f32 %v582, %v614
      %v619 = vsub.f32 %v587, %v615
      %v620 = vsub.f32 %v592, %v616
      %v621 = vsub.f32 %v597, %v617
      %v622 = vmul.f32 %v618, %v618
      %v623 = vmul.f32 %v619, %v619
      %v624 = vmul.f32 %v620, %v620
      %v625 = vmul.f32 %v621, %v621
      %v626 = vsel %vm396, %v622, 0.0
      %627 = vadd.xlane.f32.xlu0 %v626
      %v628 = vpop.xlane.xlu0 %627
      %v629 = vsel %vm396, %v623, 0.0
      %630 = vadd.xlane.f32.xlu0 %v629
      %v631 = vpop.xlane.xlu0 %630
      %v632 = vsel %vm396, %v624, 0.0
      %633 = vadd.xlane.f32.xlu0 %v632
      %v634 = vpop.xlane.xlu0 %633
      %v635 = vsel %vm396, %v625, 0.0
      %636 = vadd.xlane.f32.xlu0 %v635
      %v637 = vpop.xlane.xlu0 %636
      %v638 = vmul.f32 %v628, %v409
      %v639 = vmul.f32 %v631, %v409
      %v640 = vmul.f32 %v634, %v409
      %v641 = vmul.f32 %v637, %v409
      %v642 = vadd.f32 %v638, 1e-05
      %v643 = vadd.f32 %v639, 1e-05
      %v644 = vadd.f32 %v640, 1e-05
      %v645 = vadd.f32 %v641, 1e-05
      %v646 = vrsqrt.pop %v642
      %v647 = vrsqrt.pop %v643
      %v648 = vrsqrt.pop %v644
      %v649 = vrsqrt.pop %v645
      %v650 = vmul.f32 %v618, %v646
      %v651 = vmul.f32 %v619, %v647
      %v652 = vmul.f32 %v620, %v648
      %v653 = vmul.f32 %v621, %v649
      %v654 = vlaneseq
      %v655 = vshrl.u32 %v654, 7
      %v656 = vsub.s32 0, %v655
      %v657 = vrot.slane %v600, %v656
      %v658 = vmul.f32 %v650, %v657
      %v659 = vmul.f32 %v651, %v657
      %v660 = vmul.f32 %v652, %v657
      %v661 = vmul.f32 %v653, %v657
      %v662 = vlaneseq
      %v663 = vshrl.u32 %v662, 7
      %v664 = vsub.s32 0, %v663
      %v665 = vrot.slane %v601, %v664
      %v666 = vadd.f32 %v658, %v665
      %v667 = vadd.f32 %v659, %v665
      %v668 = vadd.f32 %v660, %v665
      %v669 = vadd.f32 %v661, %v665
      %vm670 = vcmp.gt.f32.partialorder %v666, 0.0
      %vm671 = vcmp.gt.f32.partialorder %v667, 0.0
      %vm672 = vcmp.gt.f32.partialorder %v668, 0.0
      %vm673 = vcmp.gt.f32.partialorder %v669, 0.0
      %v674 = vmul.f32 %v666, 1.442695
      %v675 = vpow.pop %v674
      %v676 = vmul.f32 %v667, 1.442695
      %v677 = vpow.pop %v676
      %v678 = vmul.f32 %v668, 1.442695
      %v679 = vpow.pop %v678
      %v680 = vmul.f32 %v669, 1.442695
      %v681 = vpow.pop %v680
      %v682 = vsub.f32 %v675, 1.0
      %v683 = vsub.f32 %v677, 1.0
      %v684 = vsub.f32 %v679, 1.0
      %v685 = vsub.f32 %v681, 1.0
      %v686 = vmul.f32 %v682, 1.6732632
      %v687 = vmul.f32 %v683, 1.6732632
      %v688 = vmul.f32 %v684, 1.6732632
      %v689 = vmul.f32 %v685, 1.6732632
      %v690 = vsel %vm670, %v666, %v686
      %v691 = vsel %vm671, %v667, %v687
      %v692 = vsel %vm672, %v668, %v688
      %v693 = vsel %vm673, %v669, %v689
      %v694 = vmul.f32 %v690, 1.050701
      %v695 = vmul.f32 %v691, 1.050701
      %v696 = vmul.f32 %v692, 1.050701
      %v697 = vmul.f32 %v693, 1.050701
      %v698 = vld [vmem:[%s2 + $0x30] sm:$0xff]
      %v699 = vld [vmem:[%s2 + $0x38] sm:$0xff]
      %v700 = vld [vmem:[%s2 + $0x40] sm:$0xff]
      %v701 = vld [vmem:[%s2 + $0x48] sm:$0xff]
      %v702 = vld [vmem:[%s2 + $0x50] sm:$0xff]
      %v703 = vld [vmem:[%s2 + $0x58] sm:$0xff]
      %v705 = vsel %vm396, %v694, 0
      %v708 = vsel %vm396, %v695, 0
      %v711 = vsel %vm396, %v696, 0
      %v714 = vsel %vm396, %v697, 0
      %716 = vmatprep.subr.mxu0 0.0
      %717 = vmatpush1.msra.mxu0 %v700
      %718 = vmatprep.subr.mxu0 0.0
      %719 = vmatpush1.msra.mxu0 %v701
      %720 = vmatprep.subr.mxu0 0.0
      %721 = vmatpush1.msra.mxu0 %v702
      %722 = vmatprep.subr.mxu0 0.0
      %723 = vmatpush1.msra.mxu0 %v703
      %724 = vmatprep.subr.mxu0 0.0
      %725 = vmatpush1.msra.mxu0 0.0
      %726 = vmatprep.subr.mxu0 0.0
      %727 = vmatpush1.msra.mxu0 0.0
      %728 = vmatprep.subr.mxu0 0.0
      %729 = vmatpush1.msra.mxu0 0.0
      %730 = vmatprep.subr.mxu0 0.0
      %731 = vmatpush1.msra.mxu0 0.0
      %732 = vmatprep.subr.mxu0 0.0
      %733 = vmatpush1.msra.mxu0 0.0
      %734 = vmatprep.subr.mxu0 0.0
      %735 = vmatpush1.msra.mxu0 0.0
      %736 = vmatprep.subr.mxu0 0.0
      %737 = vmatpush1.msra.mxu0 0.0
      %738 = vmatprep.subr.mxu0 0.0
      %739 = vmatpush1.msra.mxu0 0.0
      %740 = vmatprep.subr.mxu0 0.0
      %741 = vmatpush1.msra.mxu0 0.0
      %742 = vmatprep.subr.mxu0 0.0
      %743 = vmatpush1.msra.mxu0 0.0
      %744 = vmatprep.subr.mxu0 0.0
      %745 = vmatpush1.msra.mxu0 0.0
      %746 = vmatprep.subr.mxu0 0.0
      %747 = vmatpush1.msra.mxu0 0.0
      %748 = vmatprep.subr.mxu0 0.0
      %749 = vmatpush1.msra.mxu0 0.0
      %750 = vmatprep.subr.mxu0 0.0
      %751 = vmatpush1.msra.mxu0 0.0
      %752 = vmatprep.subr.mxu0 0.0
      %753 = vmatpush1.msra.mxu0 0.0
      %754 = vmatprep.subr.mxu0 0.0
      %755 = vmatpush1.msra.mxu0 0.0
      %756 = vmatprep.subr.mxu0 0.0
      %757 = vmatpush1.msra.mxu0 0.0
      %758 = vmatprep.subr.mxu0 0.0
      %759 = vmatpush1.msra.mxu0 0.0
      %760 = vmatprep.subr.mxu0 0.0
      %761 = vmatpush1.msra.mxu0 0.0
      %762 = vmatprep.subr.mxu0 0.0
      %763 = vmatpush1.msra.mxu0 0.0
      %764 = vmatprep.subr.mxu0 0.0
      %765 = vmatpush1.msra.mxu0 0.0
      %766 = vmatprep.subr.mxu0 0.0
      %767 = vmatpush1.msra.mxu0 0.0
      %768 = vmatprep.subr.mxu0 0.0
      %769 = vmatpush1.msra.mxu0 0.0
      %770 = vmatprep.subr.mxu0 0.0
      %771 = vmatpush1.msra.mxu0 0.0
      %772 = vmatprep.subr.mxu0 0.0
      %773 = vmatpush1.msra.mxu0 0.0
      %774 = vmatprep.subr.mxu0 0.0
      %775 = vmatpush1.msra.mxu0 0.0
      %776 = vmatprep.subr.mxu0 0.0
      %777 = vmatpush1.msra.mxu0 0.0
      %778 = vmatprep.subr.mxu0 0.0
      %779 = vmatpush1.msra.mxu0 0.0
      %780 = vmatprep.mubr.f32.mxu0 0.0
      %781 = vmatmul.mubr.f32.gmra.mrb[0].mxu0 %v705
      %v782 = vpop.f32.mrb[0].mxu0
      %v783 = vadd.f32 0.0, %v782
      %v784 = vpop.f32.mrb[0].mxu0
      %785 = vmatprep.mubr.f32.mxu0 0.0
      %786 = vmatmul.mubr.f32.gmra.mrb[0].mxu0 %v708
      %v787 = vpop.f32.mrb[0].mxu0
      %v788 = vadd.f32 0.0, %v787
      %v789 = vpop.f32.mrb[0].mxu0
      %790 = vmatprep.mubr.f32.mxu0 0.0
      %791 = vmatmul.mubr.f32.gmra.mrb[0].mxu0 %v711
      %v792 = vpop.f32.mrb[0].mxu0
      %v793 = vadd.f32 0.0, %v792
      %v794 = vpop.f32.mrb[0].mxu0
      %795 = vmatprep.mubr.f32.mxu0 0.0
      %796 = vmatmul.mubr.f32.gmra.mrb[0].mxu0 %v714
      %v797 = vpop.f32.mrb[0].mxu0
      %v798 = vadd.f32 0.0, %v797
      %v799 = vpop.f32.mrb[0].mxu0
      %800 = vdwg.mxu0
      %v802 = vsel %vm296, %v281, 0
      %v805 = vsel %vm296, %v282, 0
      %v808 = vsel %vm296, %v283, 0
      %v811 = vsel %vm296, %v284, 0
      %813 = vmatprep.subr.mxu0 0.0
      %814 = vmatpush1.msra.mxu0 %v698
      %815 = vmatprep.subr.mxu0 0.0
      %816 = vmatpush1.msra.mxu0 %v699
      %817 = vmatprep.subr.mxu0 0.0
      %818 = vmatpush1.msra.mxu0 0.0
      %819 = vmatprep.subr.mxu0 0.0
      %820 = vmatpush1.msra.mxu0 0.0
      %821 = vmatprep.subr.mxu0 0.0
      %822 = vmatpush1.msra.mxu0 0.0
      %823 = vmatprep.subr.mxu0 0.0
      %824 = vmatpush1.msra.mxu0 0.0
      %825 = vmatprep.subr.mxu0 0.0
      %826 = vmatpush1.msra.mxu0 0.0
      %827 = vmatprep.subr.mxu0 0.0
      %828 = vmatpush1.msra.mxu0 0.0
      %829 = vmatprep.subr.mxu0 0.0
      %830 = vmatpush1.msra.mxu0 0.0
      %831 = vmatprep.subr.mxu0 0.0
      %832 = vmatpush1.msra.mxu0 0.0
      %833 = vmatprep.subr.mxu0 0.0
      %834 = vmatpush1.msra.mxu0 0.0
      %835 = vmatprep.subr.mxu0 0.0
      %836 = vmatpush1.msra.mxu0 0.0
      %837 = vmatprep.subr.mxu0 0.0
      %838 = vmatpush1.msra.mxu0 0.0
      %839 = vmatprep.subr.mxu0 0.0
      %840 = vmatpush1.msra.mxu0 0.0
      %841 = vmatprep.subr.mxu0 0.0
      %842 = vmatpush1.msra.mxu0 0.0
      %843 = vmatprep.subr.mxu0 0.0
      %844 = vmatpush1.msra.mxu0 0.0
      %845 = vmatprep.subr.mxu0 0.0
      %846 = vmatpush1.msra.mxu0 0.0
      %847 = vmatprep.subr.mxu0 0.0
      %848 = vmatpush1.msra.mxu0 0.0
      %849 = vmatprep.subr.mxu0 0.0
      %850 = vmatpush1.msra.mxu0 0.0
      %851 = vmatprep.subr.mxu0 0.0
      %852 = vmatpush1.msra.mxu0 0.0
      %853 = vmatprep.subr.mxu0 0.0
      %854 = vmatpush1.msra.mxu0 0.0
      %855 = vmatprep.subr.mxu0 0.0
      %856 = vmatpush1.msra.mxu0 0.0
      %857 = vmatprep.subr.mxu0 0.0
      %858 = vmatpush1.msra.mxu0 0.0
      %859 = vmatprep.subr.mxu0 0.0
      %860 = vmatpush1.msra.mxu0 0.0
      %861 = vmatprep.subr.mxu0 0.0
      %862 = vmatpush1.msra.mxu0 0.0
      %863 = vmatprep.subr.mxu0 0.0
      %864 = vmatpush1.msra.mxu0 0.0
      %865 = vmatprep.subr.mxu0 0.0
      %866 = vmatpush1.msra.mxu0 0.0
      %867 = vmatprep.subr.mxu0 0.0
      %868 = vmatpush1.msra.mxu0 0.0
      %869 = vmatprep.subr.mxu0 0.0
      %870 = vmatpush1.msra.mxu0 0.0
      %871 = vmatprep.subr.mxu0 0.0
      %872 = vmatpush1.msra.mxu0 0.0
      %873 = vmatprep.subr.mxu0 0.0
      %874 = vmatpush1.msra.mxu0 0.0
      %875 = vmatprep.subr.mxu0 0.0
      %876 = vmatpush1.msra.mxu0 0.0
      %877 = vmatprep.mubr.f32.mxu0 0.0
      %878 = vmatmul.mubr.f32.gmra.mrb[0].mxu0 %v802
      %v879 = vpop.f32.mrb[0].mxu0
      %v880 = vadd.f32 %v783, %v879
      %v881 = vpop.f32.mrb[0].mxu0
      %882 = vmatprep.mubr.f32.mxu0 0.0
      %883 = vmatmul.mubr.f32.gmra.mrb[0].mxu0 %v805
      %v884 = vpop.f32.mrb[0].mxu0
      %v885 = vadd.f32 %v788, %v884
      %v886 = vpop.f32.mrb[0].mxu0
      %887 = vmatprep.mubr.f32.mxu0 0.0
      %888 = vmatmul.mubr.f32.gmra.mrb[0].mxu0 %v808
      %v889 = vpop.f32.mrb[0].mxu0
      %v890 = vadd.f32 %v793, %v889
      %v891 = vpop.f32.mrb[0].mxu0
      %892 = vmatprep.mubr.f32.mxu0 0.0
      %893 = vmatmul.mubr.f32.gmra.mrb[0].mxu0 %v811
      %v894 = vpop.f32.mrb[0].mxu0
      %v895 = vadd.f32 %v798, %v894
      %v896 = vpop.f32.mrb[0].mxu0
      %897 = vdwg.mxu0
      %v898 = vld [vmem:[%s3 + $0x6] sm:$0x1]
      %v899 = vlaneseq
      %v900 = vshrl.u32 %v899, 7
      %v901 = vsub.s32 0, %v900
      %v902 = vrot.slane %v898, %v901
      %v903 = vadd.f32 %v880, %v902
      %v904 = vadd.f32 %v885, %v902
      %v905 = vadd.f32 %v890, %v902
      %v906 = vadd.f32 %v895, %v902
      %v907 = vld [vmem:[%s3 + $0x7] sm:$0x1]
      %v908 = vld [vmem:[%s3 + $0x8] sm:$0x1]
      %v909 = vsel %vm396, %v903, 0.0
      %910 = vadd.xlane.f32.xlu0 %v909
      %v911 = vpop.xlane.xlu0 %910
      %v912 = vsel %vm396, %v904, 0.0
      %913 = vadd.xlane.f32.xlu0 %v912
      %v914 = vpop.xlane.xlu0 %913
      %v915 = vsel %vm396, %v905, 0.0
      %916 = vadd.xlane.f32.xlu0 %v915
      %v917 = vpop.xlane.xlu0 %916
      %v918 = vsel %vm396, %v906, 0.0
      %919 = vadd.xlane.f32.xlu0 %v918
      %v920 = vpop.xlane.xlu0 %919
      %v921 = vmul.f32 %v911, %v409
      %v922 = vmul.f32 %v914, %v409
      %v923 = vmul.f32 %v917, %v409
      %v924 = vmul.f32 %v920, %v409
      %v925 = vsub.f32 %v903, %v921
      %v926 = vsub.f32 %v904, %v922
      %v927 = vsub.f32 %v905, %v923
      %v928 = vsub.f32 %v906, %v924
      %v929 = vmul.f32 %v925, %v925
      %v930 = vmul.f32 %v926, %v926
      %v931 = vmul.f32 %v927, %v927
      %v932 = vmul.f32 %v928, %v928
      %v933 = vsel %vm396, %v929, 0.0
      %934 = vadd.xlane.f32.xlu0 %v933
      %v935 = vpop.xlane.xlu0 %934
      %v936 = vsel %vm396, %v930, 0.0
      %937 = vadd.xlane.f32.xlu0 %v936
      %v938 = vpop.xlane.xlu0 %937
      %v939 = vsel %vm396, %v931, 0.0
      %940 = vadd.xlane.f32.xlu0 %v939
      %v941 = vpop.xlane.xlu0 %940
      %v942 = vsel %vm396, %v932, 0.0
      %943 = vadd.xlane.f32.xlu0 %v942
      %v944 = vpop.xlane.xlu0 %943
      %v945 = vmul.f32 %v935, %v409
      %v946 = vmul.f32 %v938, %v409
      %v947 = vmul.f32 %v941, %v409
      %v948 = vmul.f32 %v944, %v409
      %v949 = vadd.f32 %v945, 1e-05
      %v950 = vadd.f32 %v946, 1e-05
      %v951 = vadd.f32 %v947, 1e-05
      %v952 = vadd.f32 %v948, 1e-05
      %v953 = vrsqrt.pop %v949
      %v954 = vrsqrt.pop %v950
      %v955 = vrsqrt.pop %v951
      %v956 = vrsqrt.pop %v952
      %v957 = vmul.f32 %v925, %v953
      %v958 = vmul.f32 %v926, %v954
      %v959 = vmul.f32 %v927, %v955
      %v960 = vmul.f32 %v928, %v956
      %v961 = vlaneseq
      %v962 = vshrl.u32 %v961, 7
      %v963 = vsub.s32 0, %v962
      %v964 = vrot.slane %v907, %v963
      %v965 = vmul.f32 %v957, %v964
      %v966 = vmul.f32 %v958, %v964
      %v967 = vmul.f32 %v959, %v964
      %v968 = vmul.f32 %v960, %v964
      %v969 = vlaneseq
      %v970 = vshrl.u32 %v969, 7
      %v971 = vsub.s32 0, %v970
      %v972 = vrot.slane %v908, %v971
      %v973 = vadd.f32 %v965, %v972
      %v974 = vadd.f32 %v966, %v972
      %v975 = vadd.f32 %v967, %v972
      %v976 = vadd.f32 %v968, %v972
      %vm977 = vcmp.gt.f32.partialorder %v973, 0.0
      %vm978 = vcmp.gt.f32.partialorder %v974, 0.0
      %vm979 = vcmp.gt.f32.partialorder %v975, 0.0
      %vm980 = vcmp.gt.f32.partialorder %v976, 0.0
      %v981 = vmul.f32 %v973, 1.442695
      %v982 = vpow.pop %v981
      %v983 = vmul.f32 %v974, 1.442695
      %v984 = vpow.pop %v983
      %v985 = vmul.f32 %v975, 1.442695
      %v986 = vpow.pop %v985
      %v987 = vmul.f32 %v976, 1.442695
      %v988 = vpow.pop %v987
      %v989 = vsub.f32 %v982, 1.0
      %v990 = vsub.f32 %v984, 1.0
      %v991 = vsub.f32 %v986, 1.0
      %v992 = vsub.f32 %v988, 1.0
      %v993 = vmul.f32 %v989, 1.6732632
      %v994 = vmul.f32 %v990, 1.6732632
      %v995 = vmul.f32 %v991, 1.6732632
      %v996 = vmul.f32 %v992, 1.6732632
      %v997 = vsel %vm977, %v973, %v993
      %v998 = vsel %vm978, %v974, %v994
      %v999 = vsel %vm979, %v975, %v995
      %v1000 = vsel %vm980, %v976, %v996
      %v1001 = vmul.f32 %v997, 1.050701
      %v1002 = vmul.f32 %v998, 1.050701
      %v1003 = vmul.f32 %v999, 1.050701
      %v1004 = vmul.f32 %v1000, 1.050701
      %v1005 = vld [vmem:[%s2 + $0x60] sm:$0xff]
      %v1006 = vld [vmem:[%s2 + $0x68] sm:$0xff]
      %v1007 = vld [vmem:[%s2 + $0x70] sm:$0xff]
      %v1008 = vld [vmem:[%s2 + $0x78] sm:$0xff]
      %v1009 = vld [vmem:[%s3 + $0x9] sm:$0x1]
      %v1010 = vlaneseq
      %v1011 = vshrl.u32 %v1010, 7
      %v1012 = vsub.s32 0, %v1011
      %v1013 = vrot.slane %v1009, %v1012
      %v1015 = vsel %vm396, %v1001, 0
      %v1018 = vsel %vm396, %v1002, 0
      %v1021 = vsel %vm396, %v1003, 0
      %v1024 = vsel %vm396, %v1004, 0
      %1026 = vmatprep.subr.mxu0 0.0
      %1027 = vmatpush1.msra.mxu0 %v1005
      %1028 = vmatprep.subr.mxu0 0.0
      %1029 = vmatpush1.msra.mxu0 %v1006
      %1030 = vmatprep.subr.mxu0 0.0
      %1031 = vmatpush1.msra.mxu0 %v1007
      %1032 = vmatprep.subr.mxu0 0.0
      %1033 = vmatpush1.msra.mxu0 %v1008
      %1034 = vmatprep.subr.mxu0 0.0
      %1035 = vmatpush1.msra.mxu0 0.0
      %1036 = vmatprep.subr.mxu0 0.0
      %1037 = vmatpush1.msra.mxu0 0.0
      %1038 = vmatprep.subr.mxu0 0.0
      %1039 = vmatpush1.msra.mxu0 0.0
      %1040 = vmatprep.subr.mxu0 0.0
      %1041 = vmatpush1.msra.mxu0 0.0
      %1042 = vmatprep.subr.mxu0 0.0
      %1043 = vmatpush1.msra.mxu0 0.0
      %1044 = vmatprep.subr.mxu0 0.0
      %1045 = vmatpush1.msra.mxu0 0.0
      %1046 = vmatprep.subr.mxu0 0.0
      %1047 = vmatpush1.msra.mxu0 0.0
      %1048 = vmatprep.subr.mxu0 0.0
      %1049 = vmatpush1.msra.mxu0 0.0
      %1050 = vmatprep.subr.mxu0 0.0
      %1051 = vmatpush1.msra.mxu0 0.0
      %1052 = vmatprep.subr.mxu0 0.0
      %1053 = vmatpush1.msra.mxu0 0.0
      %1054 = vmatprep.subr.mxu0 0.0
      %1055 = vmatpush1.msra.mxu0 0.0
      %1056 = vmatprep.subr.mxu0 0.0
      %1057 = vmatpush1.msra.mxu0 0.0
      %1058 = vmatprep.subr.mxu0 0.0
      %1059 = vmatpush1.msra.mxu0 0.0
      %1060 = vmatprep.subr.mxu0 0.0
      %1061 = vmatpush1.msra.mxu0 0.0
      %1062 = vmatprep.subr.mxu0 0.0
      %1063 = vmatpush1.msra.mxu0 0.0
      %1064 = vmatprep.subr.mxu0 0.0
      %1065 = vmatpush1.msra.mxu0 0.0
      %1066 = vmatprep.subr.mxu0 0.0
      %1067 = vmatpush1.msra.mxu0 0.0
      %1068 = vmatprep.subr.mxu0 0.0
      %1069 = vmatpush1.msra.mxu0 0.0
      %1070 = vmatprep.subr.mxu0 0.0
      %1071 = vmatpush1.msra.mxu0 0.0
      %1072 = vmatprep.subr.mxu0 0.0
      %1073 = vmatpush1.msra.mxu0 0.0
      %1074 = vmatprep.subr.mxu0 0.0
      %1075 = vmatpush1.msra.mxu0 0.0
      %1076 = vmatprep.subr.mxu0 0.0
      %1077 = vmatpush1.msra.mxu0 0.0
      %1078 = vmatprep.subr.mxu0 0.0
      %1079 = vmatpush1.msra.mxu0 0.0
      %1080 = vmatprep.subr.mxu0 0.0
      %1081 = vmatpush1.msra.mxu0 0.0
      %1082 = vmatprep.subr.mxu0 0.0
      %1083 = vmatpush1.msra.mxu0 0.0
      %1084 = vmatprep.subr.mxu0 0.0
      %1085 = vmatpush1.msra.mxu0 0.0
      %1086 = vmatprep.subr.mxu0 0.0
      %1087 = vmatpush1.msra.mxu0 0.0
      %1088 = vmatprep.subr.mxu0 0.0
      %1089 = vmatpush1.msra.mxu0 0.0
      %1090 = vmatprep.mubr.f32.mxu0 0.0
      %1091 = vmatmul.mubr.f32.gmra.mrb[0].mxu0 %v1015
      %v1092 = vpop.f32.mrb[0].mxu0
      %v1093 = vadd.f32 %v1013, %v1092
      %v1094 = vpop.f32.mrb[0].mxu0
      %1095 = vmatprep.mubr.f32.mxu0 0.0
      %1096 = vmatmul.mubr.f32.gmra.mrb[0].mxu0 %v1018
      %v1097 = vpop.f32.mrb[0].mxu0
      %v1098 = vadd.f32 %v1013, %v1097
      %v1099 = vpop.f32.mrb[0].mxu0
      %1100 = vmatprep.mubr.f32.mxu0 0.0
      %1101 = vmatmul.mubr.f32.gmra.mrb[0].mxu0 %v1021
      %v1102 = vpop.f32.mrb[0].mxu0
      %v1103 = vadd.f32 %v1013, %v1102
      %v1104 = vpop.f32.mrb[0].mxu0
      %1105 = vmatprep.mubr.f32.mxu0 0.0
      %1106 = vmatmul.mubr.f32.gmra.mrb[0].mxu0 %v1024
      %v1107 = vpop.f32.mrb[0].mxu0
      %v1108 = vadd.f32 %v1013, %v1107
      %v1109 = vpop.f32.mrb[0].mxu0
      %1110 = vdwg.mxu0
      %v1111 = vld [vmem:[%s3 + $0xa] sm:$0x1]
      %v1112 = vld [vmem:[%s3 + $0xb] sm:$0x1]
      %v1113 = vsel %vm396, %v1093, 0.0
      %1114 = vadd.xlane.f32.xlu0 %v1113
      %v1115 = vpop.xlane.xlu0 %1114
      %v1116 = vsel %vm396, %v1098, 0.0
      %1117 = vadd.xlane.f32.xlu0 %v1116
      %v1118 = vpop.xlane.xlu0 %1117
      %v1119 = vsel %vm396, %v1103, 0.0
      %1120 = vadd.xlane.f32.xlu0 %v1119
      %v1121 = vpop.xlane.xlu0 %1120
      %v1122 = vsel %vm396, %v1108, 0.0
      %1123 = vadd.xlane.f32.xlu0 %v1122
      %v1124 = vpop.xlane.xlu0 %1123
      %v1125 = vmul.f32 %v1115, %v409
      %v1126 = vmul.f32 %v1118, %v409
      %v1127 = vmul.f32 %v1121, %v409
      %v1128 = vmul.f32 %v1124, %v409
      %v1129 = vsub.f32 %v1093, %v1125
      %v1130 = vsub.f32 %v1098, %v1126
      %v1131 = vsub.f32 %v1103, %v1127
      %v1132 = vsub.f32 %v1108, %v1128
      %v1133 = vmul.f32 %v1129, %v1129
      %v1134 = vmul.f32 %v1130, %v1130
      %v1135 = vmul.f32 %v1131, %v1131
      %v1136 = vmul.f32 %v1132, %v1132
      %v1137 = vsel %vm396, %v1133, 0.0
      %1138 = vadd.xlane.f32.xlu0 %v1137
      %v1139 = vpop.xlane.xlu0 %1138
      %v1140 = vsel %vm396, %v1134, 0.0
      %1141 = vadd.xlane.f32.xlu0 %v1140
      %v1142 = vpop.xlane.xlu0 %1141
      %v1143 = vsel %vm396, %v1135, 0.0
      %1144 = vadd.xlane.f32.xlu0 %v1143
      %v1145 = vpop.xlane.xlu0 %1144
      %v1146 = vsel %vm396, %v1136, 0.0
      %1147 = vadd.xlane.f32.xlu0 %v1146
      %v1148 = vpop.xlane.xlu0 %1147
      %v1149 = vmul.f32 %v1139, %v409
      %v1150 = vmul.f32 %v1142, %v409
      %v1151 = vmul.f32 %v1145, %v409
      %v1152 = vmul.f32 %v1148, %v409
      %v1153 = vadd.f32 %v1149, 1e-05
      %v1154 = vadd.f32 %v1150, 1e-05
      %v1155 = vadd.f32 %v1151, 1e-05
      %v1156 = vadd.f32 %v1152, 1e-05
      %v1157 = vrsqrt.pop %v1153
      %v1158 = vrsqrt.pop %v1154
      %v1159 = vrsqrt.pop %v1155
      %v1160 = vrsqrt.pop %v1156
      %v1161 = vmul.f32 %v1129, %v1157
      %v1162 = vmul.f32 %v1130, %v1158
      %v1163 = vmul.f32 %v1131, %v1159
      %v1164 = vmul.f32 %v1132, %v1160
      %v1165 = vlaneseq
      %v1166 = vshrl.u32 %v1165, 7
      %v1167 = vsub.s32 0, %v1166
      %v1168 = vrot.slane %v1111, %v1167
      %v1169 = vmul.f32 %v1161, %v1168
      %v1170 = vmul.f32 %v1162, %v1168
      %v1171 = vmul.f32 %v1163, %v1168
      %v1172 = vmul.f32 %v1164, %v1168
      %v1173 = vlaneseq
      %v1174 = vshrl.u32 %v1173, 7
      %v1175 = vsub.s32 0, %v1174
      %v1176 = vrot.slane %v1112, %v1175
      %v1177 = vadd.f32 %v1169, %v1176
      %v1178 = vadd.f32 %v1170, %v1176
      %v1179 = vadd.f32 %v1171, %v1176
      %v1180 = vadd.f32 %v1172, %v1176
      %vm1181 = vcmp.gt.f32.partialorder %v1177, 0.0
      %vm1182 = vcmp.gt.f32.partialorder %v1178, 0.0
      %vm1183 = vcmp.gt.f32.partialorder %v1179, 0.0
      %vm1184 = vcmp.gt.f32.partialorder %v1180, 0.0
      %v1185 = vmul.f32 %v1177, 1.442695
      %v1186 = vpow.pop %v1185
      %v1187 = vmul.f32 %v1178, 1.442695
      %v1188 = vpow.pop %v1187
      %v1189 = vmul.f32 %v1179, 1.442695
      %v1190 = vpow.pop %v1189
      %v1191 = vmul.f32 %v1180, 1.442695
      %v1192 = vpow.pop %v1191
      %v1193 = vsub.f32 %v1186, 1.0
      %v1194 = vsub.f32 %v1188, 1.0
      %v1195 = vsub.f32 %v1190, 1.0
      %v1196 = vsub.f32 %v1192, 1.0
      %v1197 = vmul.f32 %v1193, 1.6732632
      %v1198 = vmul.f32 %v1194, 1.6732632
      %v1199 = vmul.f32 %v1195, 1.6732632
      %v1200 = vmul.f32 %v1196, 1.6732632
      %v1201 = vsel %vm1181, %v1177, %v1197
      %v1202 = vsel %vm1182, %v1178, %v1198
      %v1203 = vsel %vm1183, %v1179, %v1199
      %v1204 = vsel %vm1184, %v1180, %v1200
      %v1205 = vmul.f32 %v1201, 1.050701
      %v1206 = vmul.f32 %v1202, 1.050701
      %v1207 = vmul.f32 %v1203, 1.050701
      %v1208 = vmul.f32 %v1204, 1.050701
      %v1209 = vld [vmem:[%s2 + $0x80] sm:$0xff]
      %v1210 = vld [vmem:[%s2 + $0x88] sm:$0xff]
      %v1211 = vld [vmem:[%s2 + $0x90] sm:$0xff]
      %v1212 = vld [vmem:[%s2 + $0x98] sm:$0xff]
      %v1213 = vld [vmem:[%s3 + $0xc] sm:$0x1]
      %v1214 = vlaneseq
      %v1215 = vshrl.u32 %v1214, 7
      %v1216 = vsub.s32 0, %v1215
      %v1217 = vrot.slane %v1213, %v1216
      %v1219 = vsel %vm396, %v1205, 0
      %v1222 = vsel %vm396, %v1206, 0
      %v1225 = vsel %vm396, %v1207, 0
      %v1228 = vsel %vm396, %v1208, 0
      %1230 = vmatprep.subr.mxu0 0.0
      %1231 = vmatpush1.msra.mxu0 %v1209
      %1232 = vmatprep.subr.mxu0 0.0
      %1233 = vmatpush1.msra.mxu0 %v1210
      %1234 = vmatprep.subr.mxu0 0.0
      %1235 = vmatpush1.msra.mxu0 %v1211
      %1236 = vmatprep.subr.mxu0 0.0
      %1237 = vmatpush1.msra.mxu0 %v1212
      %1238 = vmatprep.subr.mxu0 0.0
      %1239 = vmatpush1.msra.mxu0 0.0
      %1240 = vmatprep.subr.mxu0 0.0
      %1241 = vmatpush1.msra.mxu0 0.0
      %1242 = vmatprep.subr.mxu0 0.0
      %1243 = vmatpush1.msra.mxu0 0.0
      %1244 = vmatprep.subr.mxu0 0.0
      %1245 = vmatpush1.msra.mxu0 0.0
      %1246 = vmatprep.subr.mxu0 0.0
      %1247 = vmatpush1.msra.mxu0 0.0
      %1248 = vmatprep.subr.mxu0 0.0
      %1249 = vmatpush1.msra.mxu0 0.0
      %1250 = vmatprep.subr.mxu0 0.0
      %1251 = vmatpush1.msra.mxu0 0.0
      %1252 = vmatprep.subr.mxu0 0.0
      %1253 = vmatpush1.msra.mxu0 0.0
      %1254 = vmatprep.subr.mxu0 0.0
      %1255 = vmatpush1.msra.mxu0 0.0
      %1256 = vmatprep.subr.mxu0 0.0
      %1257 = vmatpush1.msra.mxu0 0.0
      %1258 = vmatprep.subr.mxu0 0.0
      %1259 = vmatpush1.msra.mxu0 0.0
      %1260 = vmatprep.subr.mxu0 0.0
      %1261 = vmatpush1.msra.mxu0 0.0
      %1262 = vmatprep.subr.mxu0 0.0
      %1263 = vmatpush1.msra.mxu0 0.0
      %1264 = vmatprep.subr.mxu0 0.0
      %1265 = vmatpush1.msra.mxu0 0.0
      %1266 = vmatprep.subr.mxu0 0.0
      %1267 = vmatpush1.msra.mxu0 0.0
      %1268 = vmatprep.subr.mxu0 0.0
      %1269 = vmatpush1.msra.mxu0 0.0
      %1270 = vmatprep.subr.mxu0 0.0
      %1271 = vmatpush1.msra.mxu0 0.0
      %1272 = vmatprep.subr.mxu0 0.0
      %1273 = vmatpush1.msra.mxu0 0.0
      %1274 = vmatprep.subr.mxu0 0.0
      %1275 = vmatpush1.msra.mxu0 0.0
      %1276 = vmatprep.subr.mxu0 0.0
      %1277 = vmatpush1.msra.mxu0 0.0
      %1278 = vmatprep.subr.mxu0 0.0
      %1279 = vmatpush1.msra.mxu0 0.0
      %1280 = vmatprep.subr.mxu0 0.0
      %1281 = vmatpush1.msra.mxu0 0.0
      %1282 = vmatprep.subr.mxu0 0.0
      %1283 = vmatpush1.msra.mxu0 0.0
      %1284 = vmatprep.subr.mxu0 0.0
      %1285 = vmatpush1.msra.mxu0 0.0
      %1286 = vmatprep.subr.mxu0 0.0
      %1287 = vmatpush1.msra.mxu0 0.0
      %1288 = vmatprep.subr.mxu0 0.0
      %1289 = vmatpush1.msra.mxu0 0.0
      %1290 = vmatprep.subr.mxu0 0.0
      %1291 = vmatpush1.msra.mxu0 0.0
      %1292 = vmatprep.subr.mxu0 0.0
      %1293 = vmatpush1.msra.mxu0 0.0
      %1294 = vmatprep.mubr.f32.mxu0 0.0
      %1295 = vmatmul.mubr.f32.gmra.mrb[0].mxu0 %v1219
      %v1296 = vpop.f32.mrb[0].mxu0
      %v1297 = vadd.f32 %v1217, %v1296
      %v1298 = vpop.f32.mrb[0].mxu0
      %1299 = vmatprep.mubr.f32.mxu0 0.0
      %1300 = vmatmul.mubr.f32.gmra.mrb[0].mxu0 %v1222
      %v1301 = vpop.f32.mrb[0].mxu0
      %v1302 = vadd.f32 %v1217, %v1301
      %v1303 = vpop.f32.mrb[0].mxu0
      %1304 = vmatprep.mubr.f32.mxu0 0.0
      %1305 = vmatmul.mubr.f32.gmra.mrb[0].mxu0 %v1225
      %v1306 = vpop.f32.mrb[0].mxu0
      %v1307 = vadd.f32 %v1217, %v1306
      %v1308 = vpop.f32.mrb[0].mxu0
      %1309 = vmatprep.mubr.f32.mxu0 0.0
      %1310 = vmatmul.mubr.f32.gmra.mrb[0].mxu0 %v1228
      %v1311 = vpop.f32.mrb[0].mxu0
      %v1312 = vadd.f32 %v1217, %v1311
      %v1313 = vpop.f32.mrb[0].mxu0
      %1314 = vdwg.mxu0
      %1315 = vst.msk [vmem:[%s221] sm:$0xff] %vm296, %v1297
      %1316 = vst.msk [vmem:[%s221 + $0x8] sm:$0xff] %vm296, %v1302
      %1317 = vst.msk [vmem:[%s221 + $0x10] sm:$0xff] %vm296, %v1307
      %1318 = vst.msk [vmem:[%s221 + $0x18] sm:$0xff] %vm296, %v1312
      %s1319 = smul.u32 4, %s15
      %p1320 = scmp.lt.s32.totalorder %s1319, 7
      %s1321 = scalar_select %p1320, %s1319, 7
      %s1322 = smul.addr %s1321, 8
      %s1323 = scalar_lea.vmem %s4, %s1322
      // Predicated region
      $region37: #{tpu_custom_call.1} parent=35 // pred_check
        %p1324 = pneg %p127
      $region38: #{tpu_custom_call.1} parent=35 // pred_check_branch
        %1326 = sbr.rel (%p1324) target = $region40
      $region39: #{tpu_custom_call.1} parent=35 // pred_region
        %s1327 = smul.u32 4, %s15
      $region40: #{tpu_custom_call.1} parent=35 // pred_fallthru
        _
    $region36: #{tpu_custom_call.1} parent=5 // pred_fallthru
      _
    %p1328 = scmp.le.s32.totalorder 2, %s10
    // Predicated region
    $region41: #{tpu_custom_call.1} parent=5 // pred_check
      %p1329 = pneg %p1328
    $region42: #{tpu_custom_call.1} parent=5 // pred_check_branch
      %1331 = sbr.rel (%p1329) target = $region44
    $region43: #{tpu_custom_call.1} parent=5 // pred_region
      %s1332 = ssub.s32 %s10, 2
      // Predicated region
      $region45: #{tpu_custom_call.1} parent=43 // pred_check
        %p1333 = pneg %p133
      $region46: #{tpu_custom_call.1} parent=43 // pred_check_branch
        %1335 = sbr.rel (%p1333) target = $region48
      $region47: #{tpu_custom_call.1} parent=43 // pred_region
        %s1336 = smul.u32 4, %s16
        %p1337 = scmp.lt.s32.totalorder %s1336, 7
        %s1338 = scalar_select %p1337, %s1336, 7
        %s1339 = smul.addr %s1338, 8
        %s1340 = scalar_lea.vmem %s4, %s1339
      $region48: #{tpu_custom_call.1} parent=43 // pred_fallthru
        _
    $region44: #{tpu_custom_call.1} parent=5 // pred_fallthru
      _
  $region6: #{tpu_custom_call.1} parent=0 // loop_footer
    %s14 = sadd.s32 1, %s10
  $region7: #{tpu_custom_call.1} parent=0 // loop_footer_branch
    %9 = sbr.rel target = $region3
  $region8: #{tpu_custom_call.1} parent=0 // loop_exit
    _

</llo_original>
